<compile_context>
chip_gen: v7x
topology: tpu7x:2x2x1
jax: 0.10.0
libtpu: 0.0.40
codegen_flags: <defaults>
</compile_context>

<pallas_src>
import math

import numpy as np
import jax
import jax.numpy as jnp
from jax.experimental import pallas as pl
from jax.experimental.pallas import tpu as pltpu

# ----------------------------- configuration ---------------------------------
BATCH = 2          # batch size
IN_CH = 3          # RGB input channels
IN_CH_PAD = 8      # stem input channels padded to the f32 sublane tile
IMG = 16           # input spatial size (small stand-in for 224)
C1 = 16            # stem / stage-1 width   (stand-in for 64)
C2 = 32            # stage-2 / output width (stand-in for 512)
ENC = 4            # encoded_image_size     (stand-in for 14)
EPS = 1e-5         # BatchNorm eps

# Flat per-image geometry: every activation is a (channels, positions) matrix
# whose position axis enumerates a zero-padded (IMG+2)x(IMG+2) grid (1-pixel
# conv halo) flattened row-major, then lane-padded to a multiple of 128.
H_A = IMG                    # 16x16 stage
WP_A = H_A + 2               # padded width (18)
NP_A = WP_A * WP_A           # padded positions per image (324)
R_A = 384                    # lane-padded width (multiple of 128)

H_B = IMG // 2               # 8x8 stage
WP_B = H_B + 2               # 10
NP_B = WP_B * WP_B           # 100
R_B = 128                    # lane-padded width


# ----------------------------- Pallas kernel ---------------------------------
def _conv3x3(act, w_ref, wp):
    """3x3 'same' conv on a flat (C, R) activation via 9 lane rolls + 1 matmul.

    Tap (di, dj) needs act[:, p + di*wp + dj] at output position p; rolling by
    the negated offset brings that column to lane p.  Roll wrap-around only
    ever lands on positions that are masked to zero downstream, and taps of
    valid (interior) positions never wrap.  MXU inputs bf16, accumulation f32.
    """
    width = act.shape[-1]
    offs = [di * wp + dj for di in (-1, 0, 1) for dj in (-1, 0, 1)]
    patches = jnp.concatenate(
        [pltpu.roll(act, shift=(-off) % width, axis=1) for off in offs], axis=0)
    return jnp.dot(w_ref[...], patches.astype(jnp.bfloat16),
                   preferred_element_type=jnp.float32)


def vision_encoder_kernel(x_ref,
                          w1_ref, b1_ref,      # stem conv (BN scale folded in)
                          w2_ref, b2_ref,      # block1 conv1
                          w3_ref, b3_ref,      # block1 conv2
                          wf_ref, bf_ref,      # block2 conv1 + 1x1 shortcut (fused)
                          w5_ref, b5_ref,      # block2 conv2
                          mask_a_ref, mask_b_ref, down_ref, pool_ref,
                          out_ref):
    mask_a = mask_a_ref[...]                   # (1, R_A): 1 on the 16x16 interior
    mask_b = mask_b_ref[...]                   # (1, R_B): 1 on the 8x8 interior

    # ---- stem: conv3x3(3 -> C1) + BN + ReLU ---------------------------------
    x = x_ref[0]                                               # (8, R_A) f32
    a1 = jnp.maximum(_conv3x3(x, w1_ref, WP_A) + b1_ref[...], 0.0) * mask_a

    # ---- stage 1: basic residual block (C1 -> C1, stride 1) -----------------
    a2 = jnp.maximum(_conv3x3(a1, w2_ref, WP_A) + b2_ref[...], 0.0) * mask_a
    a3 = jnp.maximum(_conv3x3(a2, w3_ref, WP_A) + b3_ref[...] + a1, 0.0) * mask_a

    # ---- stage 2: downsampling residual block (C1 -> C2, stride 2) ----------
    # One fused im2col matmul emits [conv4 | 1x1 shortcut] stacked on Cout;
    # one 0/1 selection matmul picks the stride-2 centres and re-embeds them
    # into the padded 8x8 grid, BEFORE bias/ReLU (elementwise on 128 lanes).
    y = _conv3x3(a3, wf_ref, WP_A)                             # (2*C2, R_A)
    y = jnp.dot(y.astype(jnp.bfloat16), down_ref[...],
                preferred_element_type=jnp.float32)            # (2*C2, R_B)
    y = y + bf_ref[...]
    main = jnp.maximum(y[:C2, :], 0.0) * mask_b   # feeds conv5 -> halo must be 0
    sc = y[C2:, :]                                # shortcut: read only at interior

    # conv5 + BN, add shortcut, ReLU.  No mask: the pool matrix only reads the
    # interior positions, so halo/tail garbage is never observed.
    feat = jnp.maximum(_conv3x3(main, w5_ref, WP_B) + b5_ref[...] + sc, 0.0)

    # ---- ENC x ENC adaptive average pool head (channels-major) --------------
    out_ref[0] = jnp.dot(feat.astype(jnp.bfloat16), pool_ref[...],
                         preferred_element_type=jnp.float32)   # (C2, ENC*ENC)


# ----------------------------- parameters & constants ------------------------
def init_params(key):
    """Deterministic synthetic weights for the mini ResNet-style backbone."""
    ks = jax.random.split(key, 12)

    def conv_w(k, kh, kw, cin, cout):
        std = math.sqrt(2.0 / (kh * kw * cin))
        return jax.random.normal(k, (kh, kw, cin, cout), jnp.float32) * std

    def bn(k, c):
        g = 1.0 + 0.1 * jax.random.normal(jax.random.fold_in(k, 0), (c,), jnp.float32)
        b = 0.1 * jax.random.normal(jax.random.fold_in(k, 1), (c,), jnp.float32)
        m = 0.1 * jax.random.normal(jax.random.fold_in(k, 2), (c,), jnp.float32)
        v = 1.0 + 0.1 * jnp.abs(jax.random.normal(jax.random.fold_in(k, 3), (c,), jnp.float32))
        return (g, b, m, v)

    return dict(
        conv1=conv_w(ks[0], 3, 3, IN_CH, C1), bn1=bn(ks[1], C1),
        conv2=conv_w(ks[2], 3, 3, C1, C1),    bn2=bn(ks[3], C1),
        conv3=conv_w(ks[4], 3, 3, C1, C1),    bn3=bn(ks[5], C1),
        conv4=conv_w(ks[6], 3, 3, C1, C2),    bn4=bn(ks[7], C2),
        conv5=conv_w(ks[8], 3, 3, C2, C2),    bn5=bn(ks[9], C2),
        convd=conv_w(ks[10], 1, 1, C1, C2),   bnd=bn(ks[11], C2),
    )


def _fold(w, bn_tuple):
    """Fold inference BatchNorm into the conv.

    Returns (W, bias): W (Cout, kh*kw*Cin) f32 with the BN scale folded into
    the weight rows, bias (Cout, 1) f32, so that y = W @ patches + bias.
    """
    g, b, m, v = bn_tuple
    s = g / jnp.sqrt(v + EPS)
    bias = (b - m * s).reshape(-1, 1)
    cout = w.shape[-1]
    wf = jnp.transpose(w, (3, 0, 1, 2)).reshape(cout, -1) * s.reshape(-1, 1)
    return wf, bias


def _build_constants():
    """Interior masks, stride-2 selection matrix and ENCxENC pooling matrix."""
    mask_a = np.zeros((1, R_A), np.float32)
    for h in range(1, H_A + 1):
        for w in range(1, H_A + 1):
            mask_a[0, h * WP_A + w] = 1.0

    mask_b = np.zeros((1, R_B), np.float32)
    for h in range(1, H_B + 1):
        for w in range(1, H_B + 1):
            mask_b[0, h * WP_B + w] = 1.0

    # stride-2 centre selection: padded 16x16 positions -> padded 8x8 positions
    down = np.zeros((R_A, R_B), np.float32)
    for h2 in range(H_B):
        for w2 in range(H_B):
            src = (2 * h2 + 1) * WP_A + (2 * w2 + 1)
            dst = (h2 + 1) * WP_B + (w2 + 1)
            down[src, dst] = 1.0

    # AdaptiveAvgPool2d((ENC, ENC)) over the 8x8 interior: uniform 2x2 bins.
    bin_sz = H_B // ENC
    pool = np.zeros((R_B, ENC * ENC), np.float32)
    for ho in range(ENC):
        for wo in range(ENC):
            for dh in range(bin_sz):
                for dw in range(bin_sz):
                    src = (ho * bin_sz + dh + 1) * WP_B + (wo * bin_sz + dw + 1)
                    pool[src, ho * ENC + wo] = 1.0 / (bin_sz * bin_sz)

    return (jnp.asarray(mask_a), jnp.asarray(mask_b),
            jnp.asarray(down), jnp.asarray(pool))


def prepare_params(raw):
    """Fold BN, fuse the 1x1 shortcut into conv4, pre-cast MXU operands to bf16."""
    w1, b1 = _fold(raw["conv1"], raw["bn1"])
    w2, b2 = _fold(raw["conv2"], raw["bn2"])
    w3, b3 = _fold(raw["conv3"], raw["bn3"])
    w4, b4 = _fold(raw["conv4"], raw["bn4"])
    w5, b5 = _fold(raw["conv5"], raw["bn5"])
    wd, bd = _fold(raw["convd"], raw["bnd"])                 # (C2, C1)

    # Pad the stem's Cin to the 8-row sublane tile (zero weight columns match
    # the zero-padded input channels of the kernel's input layout).
    w1 = jnp.pad(w1.reshape(C1, 9, IN_CH),
                 ((0, 0), (0, 0), (0, IN_CH_PAD - IN_CH))).reshape(C1, 9 * IN_CH_PAD)

    # Fuse the 1x1 stride-2 shortcut into conv4's centre tap (columns
    # [4*C1, 5*C1)) so a single matmul yields [conv4 | shortcut] on Cout.
    wf4 = jnp.zeros((2 * C2, 9 * C1), jnp.float32)
    wf4 = wf4.at[:C2, :].set(w4)
    wf4 = wf4.at[C2:, 4 * C1:5 * C1].set(wd)
    bf4 = jnp.concatenate([b4, bd], axis=0)

    mask_a, mask_b, down, pool = _build_constants()
    bf16 = lambda a: a.astype(jnp.bfloat16)
    return (bf16(w1), b1, bf16(w2), b2, bf16(w3), b3,
            bf16(wf4), bf4, bf16(w5), b5,
            mask_a, mask_b, bf16(down), bf16(pool))


# ----------------------------- forward ---------------------------------------
@jax.jit
def vision_encoder_forward(params, images):
    """images: (B, 3, IMG, IMG) NCHW.  Returns (out, out_cnn) like the module:
       out:     (B, C2, 1, 1)      AdaptiveAvgPool2d((1,1)) of the feature map
       out_cnn: (B, ENC, ENC, C2)  AdaptiveAvgPool2d((ENC,ENC)), NHWC-permuted
    """
    (w1, b1, w2, b2, w3, b3, wf4, bf4, w5, b5,
     mask_a, mask_b, down, pool) = params

    # Layout glue: NCHW -> per-image padded flat positions on lanes, channels
    # (padded to 8) on sublanes.
    x = images.astype(jnp.float32)
    x = jnp.pad(x, ((0, 0), (0, IN_CH_PAD - IN_CH), (1, 1), (1, 1)))
    x = x.reshape(BATCH, IN_CH_PAD, NP_A)
    x = jnp.pad(x, ((0, 0), (0, 0), (0, R_A - NP_A)))          # (B, 8, R_A)

    full = lambda a: pl.BlockSpec(a.shape, lambda b: (0,) * a.ndim)
    pooled = pl.pallas_call(
        vision_encoder_kernel,
        grid=(BATCH,),                      # one image per step; 2 TCs on v7x
        in_specs=[pl.BlockSpec((1, IN_CH_PAD, R_A), lambda b: (b, 0, 0)),
                  full(w1), full(b1), full(w2), full(b2), full(w3), full(b3),
                  full(wf4), full(bf4), full(w5), full(b5),
                  full(mask_a), full(mask_b), full(down), full(pool)],
        out_specs=pl.BlockSpec((1, C2, ENC * ENC), lambda b: (b, 0, 0)),
        out_shape=jax.ShapeDtypeStruct((BATCH, C2, ENC * ENC), jnp.float32),
        compiler_params=pltpu.CompilerParams(dimension_semantics=("parallel",)),
    )(x, w1, b1, w2, b2, w3, b3, wf4, bf4, w5, b5, mask_a, mask_b, down, pool)

    # (B, C2, E*E) -> (B, E, E, C2)
    out_cnn = jnp.transpose(pooled, (0, 2, 1)).reshape(BATCH, ENC, ENC, C2)
    # AdaptiveAvgPool2d((1,1)) == mean of the ENCxENC bin means (the bins
    # partition the 8x8 map into equal 2x2 cells), so derive it exactly.
    out = jnp.mean(out_cnn, axis=(1, 2)).reshape(BATCH, C2, 1, 1)
    return out, out_cnn


# ----------------------------- pure-JAX reference ----------------------------
def reference_forward(raw, images):
    x = jnp.transpose(images, (0, 2, 3, 1)).astype(jnp.float32)

    def conv(x, w, stride, pad):
        return jax.lax.conv_general_dilated(
            x, w, (stride, stride), ((pad, pad), (pad, pad)),
            dimension_numbers=("NHWC", "HWIO", "NHWC"),
            precision=jax.lax.Precision.HIGHEST)

    def bn(x, bn_t):
        g, b, m, v = bn_t
        s = g / jnp.sqrt(v + EPS)
        return x * s.reshape(1, 1, 1, -1) + (b - m * s).reshape(1, 1, 1, -1)

    y = jax.nn.relu(bn(conv(x, raw["conv1"], 1, 1), raw["bn1"]))
    r = y
    y = jax.nn.relu(bn(conv(y, raw["conv2"], 1, 1), raw["bn2"]))
    y = bn(conv(y, raw["conv3"], 1, 1), raw["bn3"])
    y = jax.nn.relu(y + r)
    r = bn(conv(y, raw["convd"], 2, 0), raw["bnd"])
    y = jax.nn.relu(bn(conv(y, raw["conv4"], 2, 1), raw["bn4"]))
    y = bn(conv(y, raw["conv5"], 1, 1), raw["bn5"])
    y = jax.nn.relu(y + r)                                     # (B, 8, 8, C2)

    bin_sz = H_B // ENC
    out_cnn = y.reshape(BATCH, ENC, bin_sz, ENC, bin_sz, C2).mean(axis=(2, 4))
    out = y.mean(axis=(1, 2)).reshape(BATCH, C2, 1, 1)
    return out, out_cnn


# ----------------------------- main -------------------------------------------
if __name__ == "__main__":
    key = jax.random.PRNGKey(0)
    kp, ki = jax.random.split(key)

    raw = init_params(kp)
    params = prepare_params(raw)
    images = jax.random.normal(ki, (BATCH, IN_CH, IMG, IMG), jnp.float32)

    out, out_cnn = vision_encoder_forward(params, images)
    jax.block_until_ready((out, out_cnn))

    assert out.shape == (BATCH, C2, 1, 1)
    assert out_cnn.shape == (BATCH, ENC, ENC, C2)

    ref_out, ref_cnn = reference_forward(raw, images)
    # bf16 MXU inputs vs an f32-HIGHEST reference: ~1% expected deviation,
    # far below any real bug (wrong tap / selection / pooling => O(0.1-1)).
    np.testing.assert_allclose(np.asarray(out), np.asarray(ref_out),
                               rtol=5e-2, atol=2e-2)
    np.testing.assert_allclose(np.asarray(out_cnn), np.asarray(ref_cnn),
                               rtol=5e-2, atol=2e-2)

    print("KERNEL_OK")
</pallas_src>

<mosaic_0001>
module attributes {stable_mosaic.version = 11 : i64} {
  func.func @vision_encoder_kernel(%arg0: i32, %arg1: memref<1x8x384xf32, #tpu.memory_space<vmem>>, %arg2: memref<16x72xbf16, #tpu.memory_space<vmem>>, %arg3: memref<16x1xf32, #tpu.memory_space<vmem>>, %arg4: memref<16x144xbf16, #tpu.memory_space<vmem>>, %arg5: memref<16x1xf32, #tpu.memory_space<vmem>>, %arg6: memref<16x144xbf16, #tpu.memory_space<vmem>>, %arg7: memref<16x1xf32, #tpu.memory_space<vmem>>, %arg8: memref<64x144xbf16, #tpu.memory_space<vmem>>, %arg9: memref<64x1xf32, #tpu.memory_space<vmem>>, %arg10: memref<32x288xbf16, #tpu.memory_space<vmem>>, %arg11: memref<32x1xf32, #tpu.memory_space<vmem>>, %arg12: memref<1x384xf32, #tpu.memory_space<vmem>>, %arg13: memref<1x128xf32, #tpu.memory_space<vmem>>, %arg14: memref<384x128xbf16, #tpu.memory_space<vmem>>, %arg15: memref<128x16xbf16, #tpu.memory_space<vmem>>, %arg16: memref<1x32x16xf32, #tpu.memory_space<vmem>>) attributes {dimension_semantics = [#tpu.dimension_semantics<parallel>], iteration_bounds = array<i64: 2>, scalar_prefetch = 0 : i64, scratch_operands = 0 : i64, tpu.core_type = #tpu.core_type<tc>, window_params = [{transform_indices = @transform_0, window_bounds = array<i64: 1, 8, 384>}, {pipeline_mode = #tpu.pipeline_mode<synchronous>, transform_indices = @transform_1, window_bounds = array<i64: 16, 72>}, {pipeline_mode = #tpu.pipeline_mode<synchronous>, transform_indices = @transform_2, window_bounds = array<i64: 16, 1>}, {pipeline_mode = #tpu.pipeline_mode<synchronous>, transform_indices = @transform_3, window_bounds = array<i64: 16, 144>}, {pipeline_mode = #tpu.pipeline_mode<synchronous>, transform_indices = @transform_4, window_bounds = array<i64: 16, 1>}, {pipeline_mode = #tpu.pipeline_mode<synchronous>, transform_indices = @transform_5, window_bounds = array<i64: 16, 144>}, {pipeline_mode = #tpu.pipeline_mode<synchronous>, transform_indices = @transform_6, window_bounds = array<i64: 16, 1>}, {pipeline_mode = #tpu.pipeline_mode<synchronous>, transform_indices = @transform_7, window_bounds = array<i64: 64, 144>}, {pipeline_mode = #tpu.pipeline_mode<synchronous>, transform_indices = @transform_8, window_bounds = array<i64: 64, 1>}, {pipeline_mode = #tpu.pipeline_mode<synchronous>, transform_indices = @transform_9, window_bounds = array<i64: 32, 288>}, {pipeline_mode = #tpu.pipeline_mode<synchronous>, transform_indices = @transform_10, window_bounds = array<i64: 32, 1>}, {pipeline_mode = #tpu.pipeline_mode<synchronous>, transform_indices = @transform_11, window_bounds = array<i64: 1, 384>}, {pipeline_mode = #tpu.pipeline_mode<synchronous>, transform_indices = @transform_12, window_bounds = array<i64: 1, 128>}, {pipeline_mode = #tpu.pipeline_mode<synchronous>, transform_indices = @transform_13, window_bounds = array<i64: 384, 128>}, {pipeline_mode = #tpu.pipeline_mode<synchronous>, transform_indices = @transform_14, window_bounds = array<i64: 128, 16>}, {transform_indices = @transform_15, window_bounds = array<i64: 1, 32, 16>}]} {
    %c0 = arith.constant 0 : index
    %c0_0 = arith.constant 0 : index
    %0 = vector.load %arg12[%c0, %c0_0] : memref<1x384xf32, #tpu.memory_space<vmem>>, vector<1x384xf32>
    %c0_1 = arith.constant 0 : index
    %c0_2 = arith.constant 0 : index
    %1 = vector.load %arg13[%c0_1, %c0_2] : memref<1x128xf32, #tpu.memory_space<vmem>>, vector<1x128xf32>
    %c0_3 = arith.constant 0 : index
    %c0_4 = arith.constant 0 : index
    %c0_5 = arith.constant 0 : index
    %2 = vector.load %arg1[%c0_3, %c0_4, %c0_5] : memref<1x8x384xf32, #tpu.memory_space<vmem>>, vector<1x8x384xf32>
    %3 = vector.shape_cast %2 : vector<1x8x384xf32> to vector<8x384xf32>
    %c19_i32 = arith.constant 19 : i32
    %4 = tpu.dynamic_rotate %3 by %c19_i32 dim 1 : vector<8x384xf32>, i32 -> vector<8x384xf32>
    %c18_i32 = arith.constant 18 : i32
    %5 = tpu.dynamic_rotate %3 by %c18_i32 dim 1 : vector<8x384xf32>, i32 -> vector<8x384xf32>
    %c17_i32 = arith.constant 17 : i32
    %6 = tpu.dynamic_rotate %3 by %c17_i32 dim 1 : vector<8x384xf32>, i32 -> vector<8x384xf32>
    %c1_i32 = arith.constant 1 : i32
    %7 = tpu.dynamic_rotate %3 by %c1_i32 dim 1 : vector<8x384xf32>, i32 -> vector<8x384xf32>
    %c0_i32 = arith.constant 0 : i32
    %8 = tpu.dynamic_rotate %3 by %c0_i32 dim 1 : vector<8x384xf32>, i32 -> vector<8x384xf32>
    %c383_i32 = arith.constant 383 : i32
    %9 = tpu.dynamic_rotate %3 by %c383_i32 dim 1 : vector<8x384xf32>, i32 -> vector<8x384xf32>
    %c367_i32 = arith.constant 367 : i32
    %10 = tpu.dynamic_rotate %3 by %c367_i32 dim 1 : vector<8x384xf32>, i32 -> vector<8x384xf32>
    %c366_i32 = arith.constant 366 : i32
    %11 = tpu.dynamic_rotate %3 by %c366_i32 dim 1 : vector<8x384xf32>, i32 -> vector<8x384xf32>
    %c365_i32 = arith.constant 365 : i32
    %12 = tpu.dynamic_rotate %3 by %c365_i32 dim 1 : vector<8x384xf32>, i32 -> vector<8x384xf32>
    %13 = tpu.concatenate %4, %5, %6, %7, %8, %9, %10, %11, %12 in 0 : vector<8x384xf32>, vector<8x384xf32>, vector<8x384xf32>, vector<8x384xf32>, vector<8x384xf32>, vector<8x384xf32>, vector<8x384xf32>, vector<8x384xf32>, vector<8x384xf32> -> vector<72x384xf32>
    %c0_6 = arith.constant 0 : index
    %c0_7 = arith.constant 0 : index
    %14 = vector.load %arg2[%c0_6, %c0_7] : memref<16x72xbf16, #tpu.memory_space<vmem>>, vector<16x72xbf16>
    %15 = arith.truncf %13 : vector<72x384xf32> to vector<72x384xbf16>
    %cst = arith.constant dense<0.000000e+00> : vector<16x384xf32>
    %16 = tpu.matmul %14, %15, %cst {dimension_numbers = #tpu.dot_dimension_numbers<[1], [0], [0], [1], [0, 0, 1, 1], [], []>} : vector<16x72xbf16>, vector<72x384xbf16>, vector<16x384xf32> -> vector<16x384xf32>
    %c0_8 = arith.constant 0 : index
    %c0_9 = arith.constant 0 : index
    %17 = vector.load %arg3[%c0_8, %c0_9] : memref<16x1xf32, #tpu.memory_space<vmem>>, vector<16x1xf32>
    %18 = vector.broadcast %17 : vector<16x1xf32> to vector<16x384xf32>
    %19 = arith.addf %16, %18 : vector<16x384xf32>
    %cst_10 = arith.constant 0.000000e+00 : f32
    %20 = vector.broadcast %cst_10 : f32 to vector<16x384xf32>
    %21 = arith.maximumf %19, %20 : vector<16x384xf32>
    %22 = vector.broadcast %0 : vector<1x384xf32> to vector<16x384xf32>
    %23 = arith.mulf %21, %22 : vector<16x384xf32>
    %c19_i32_11 = arith.constant 19 : i32
    %24 = tpu.dynamic_rotate %23 by %c19_i32_11 dim 1 : vector<16x384xf32>, i32 -> vector<16x384xf32>
    %c18_i32_12 = arith.constant 18 : i32
    %25 = tpu.dynamic_rotate %23 by %c18_i32_12 dim 1 : vector<16x384xf32>, i32 -> vector<16x384xf32>
    %c17_i32_13 = arith.constant 17 : i32
    %26 = tpu.dynamic_rotate %23 by %c17_i32_13 dim 1 : vector<16x384xf32>, i32 -> vector<16x384xf32>
    %c1_i32_14 = arith.constant 1 : i32
    %27 = tpu.dynamic_rotate %23 by %c1_i32_14 dim 1 : vector<16x384xf32>, i32 -> vector<16x384xf32>
    %c0_i32_15 = arith.constant 0 : i32
    %28 = tpu.dynamic_rotate %23 by %c0_i32_15 dim 1 : vector<16x384xf32>, i32 -> vector<16x384xf32>
    %c383_i32_16 = arith.constant 383 : i32
    %29 = tpu.dynamic_rotate %23 by %c383_i32_16 dim 1 : vector<16x384xf32>, i32 -> vector<16x384xf32>
    %c367_i32_17 = arith.constant 367 : i32
    %30 = tpu.dynamic_rotate %23 by %c367_i32_17 dim 1 : vector<16x384xf32>, i32 -> vector<16x384xf32>
    %c366_i32_18 = arith.constant 366 : i32
    %31 = tpu.dynamic_rotate %23 by %c366_i32_18 dim 1 : vector<16x384xf32>, i32 -> vector<16x384xf32>
    %c365_i32_19 = arith.constant 365 : i32
    %32 = tpu.dynamic_rotate %23 by %c365_i32_19 dim 1 : vector<16x384xf32>, i32 -> vector<16x384xf32>
    %33 = tpu.concatenate %24, %25, %26, %27, %28, %29, %30, %31, %32 in 0 : vector<16x384xf32>, vector<16x384xf32>, vector<16x384xf32>, vector<16x384xf32>, vector<16x384xf32>, vector<16x384xf32>, vector<16x384xf32>, vector<16x384xf32>, vector<16x384xf32> -> vector<144x384xf32>
    %c0_20 = arith.constant 0 : index
    %c0_21 = arith.constant 0 : index
    %34 = vector.load %arg4[%c0_20, %c0_21] : memref<16x144xbf16, #tpu.memory_space<vmem>>, vector<16x144xbf16>
    %35 = arith.truncf %33 : vector<144x384xf32> to vector<144x384xbf16>
    %cst_22 = arith.constant dense<0.000000e+00> : vector<16x384xf32>
    %36 = tpu.matmul %34, %35, %cst_22 {dimension_numbers = #tpu.dot_dimension_numbers<[1], [0], [0], [1], [0, 0, 1, 1], [], []>} : vector<16x144xbf16>, vector<144x384xbf16>, vector<16x384xf32> -> vector<16x384xf32>
    %c0_23 = arith.constant 0 : index
    %c0_24 = arith.constant 0 : index
    %37 = vector.load %arg5[%c0_23, %c0_24] : memref<16x1xf32, #tpu.memory_space<vmem>>, vector<16x1xf32>
    %38 = vector.broadcast %37 : vector<16x1xf32> to vector<16x384xf32>
    %39 = arith.addf %36, %38 : vector<16x384xf32>
    %cst_25 = arith.constant 0.000000e+00 : f32
    %40 = vector.broadcast %cst_25 : f32 to vector<16x384xf32>
    %41 = arith.maximumf %39, %40 : vector<16x384xf32>
    %42 = vector.broadcast %0 : vector<1x384xf32> to vector<16x384xf32>
    %43 = arith.mulf %41, %42 : vector<16x384xf32>
    %c19_i32_26 = arith.constant 19 : i32
    %44 = tpu.dynamic_rotate %43 by %c19_i32_26 dim 1 : vector<16x384xf32>, i32 -> vector<16x384xf32>
    %c18_i32_27 = arith.constant 18 : i32
    %45 = tpu.dynamic_rotate %43 by %c18_i32_27 dim 1 : vector<16x384xf32>, i32 -> vector<16x384xf32>
    %c17_i32_28 = arith.constant 17 : i32
    %46 = tpu.dynamic_rotate %43 by %c17_i32_28 dim 1 : vector<16x384xf32>, i32 -> vector<16x384xf32>
    %c1_i32_29 = arith.constant 1 : i32
    %47 = tpu.dynamic_rotate %43 by %c1_i32_29 dim 1 : vector<16x384xf32>, i32 -> vector<16x384xf32>
    %c0_i32_30 = arith.constant 0 : i32
    %48 = tpu.dynamic_rotate %43 by %c0_i32_30 dim 1 : vector<16x384xf32>, i32 -> vector<16x384xf32>
    %c383_i32_31 = arith.constant 383 : i32
    %49 = tpu.dynamic_rotate %43 by %c383_i32_31 dim 1 : vector<16x384xf32>, i32 -> vector<16x384xf32>
    %c367_i32_32 = arith.constant 367 : i32
    %50 = tpu.dynamic_rotate %43 by %c367_i32_32 dim 1 : vector<16x384xf32>, i32 -> vector<16x384xf32>
    %c366_i32_33 = arith.constant 366 : i32
    %51 = tpu.dynamic_rotate %43 by %c366_i32_33 dim 1 : vector<16x384xf32>, i32 -> vector<16x384xf32>
    %c365_i32_34 = arith.constant 365 : i32
    %52 = tpu.dynamic_rotate %43 by %c365_i32_34 dim 1 : vector<16x384xf32>, i32 -> vector<16x384xf32>
    %53 = tpu.concatenate %44, %45, %46, %47, %48, %49, %50, %51, %52 in 0 : vector<16x384xf32>, vector<16x384xf32>, vector<16x384xf32>, vector<16x384xf32>, vector<16x384xf32>, vector<16x384xf32>, vector<16x384xf32>, vector<16x384xf32>, vector<16x384xf32> -> vector<144x384xf32>
    %c0_35 = arith.constant 0 : index
    %c0_36 = arith.constant 0 : index
    %54 = vector.load %arg6[%c0_35, %c0_36] : memref<16x144xbf16, #tpu.memory_space<vmem>>, vector<16x144xbf16>
    %55 = arith.truncf %53 : vector<144x384xf32> to vector<144x384xbf16>
    %cst_37 = arith.constant dense<0.000000e+00> : vector<16x384xf32>
    %56 = tpu.matmul %54, %55, %cst_37 {dimension_numbers = #tpu.dot_dimension_numbers<[1], [0], [0], [1], [0, 0, 1, 1], [], []>} : vector<16x144xbf16>, vector<144x384xbf16>, vector<16x384xf32> -> vector<16x384xf32>
    %c0_38 = arith.constant 0 : index
    %c0_39 = arith.constant 0 : index
    %57 = vector.load %arg7[%c0_38, %c0_39] : memref<16x1xf32, #tpu.memory_space<vmem>>, vector<16x1xf32>
    %58 = vector.broadcast %57 : vector<16x1xf32> to vector<16x384xf32>
    %59 = arith.addf %56, %58 : vector<16x384xf32>
    %60 = arith.addf %59, %23 : vector<16x384xf32>
    %cst_40 = arith.constant 0.000000e+00 : f32
    %61 = vector.broadcast %cst_40 : f32 to vector<16x384xf32>
    %62 = arith.maximumf %60, %61 : vector<16x384xf32>
    %63 = vector.broadcast %0 : vector<1x384xf32> to vector<16x384xf32>
    %64 = arith.mulf %62, %63 : vector<16x384xf32>
    %c19_i32_41 = arith.constant 19 : i32
    %65 = tpu.dynamic_rotate %64 by %c19_i32_41 dim 1 : vector<16x384xf32>, i32 -> vector<16x384xf32>
    %c18_i32_42 = arith.constant 18 : i32
    %66 = tpu.dynamic_rotate %64 by %c18_i32_42 dim 1 : vector<16x384xf32>, i32 -> vector<16x384xf32>
    %c17_i32_43 = arith.constant 17 : i32
    %67 = tpu.dynamic_rotate %64 by %c17_i32_43 dim 1 : vector<16x384xf32>, i32 -> vector<16x384xf32>
    %c1_i32_44 = arith.constant 1 : i32
    %68 = tpu.dynamic_rotate %64 by %c1_i32_44 dim 1 : vector<16x384xf32>, i32 -> vector<16x384xf32>
    %c0_i32_45 = arith.constant 0 : i32
    %69 = tpu.dynamic_rotate %64 by %c0_i32_45 dim 1 : vector<16x384xf32>, i32 -> vector<16x384xf32>
    %c383_i32_46 = arith.constant 383 : i32
    %70 = tpu.dynamic_rotate %64 by %c383_i32_46 dim 1 : vector<16x384xf32>, i32 -> vector<16x384xf32>
    %c367_i32_47 = arith.constant 367 : i32
    %71 = tpu.dynamic_rotate %64 by %c367_i32_47 dim 1 : vector<16x384xf32>, i32 -> vector<16x384xf32>
    %c366_i32_48 = arith.constant 366 : i32
    %72 = tpu.dynamic_rotate %64 by %c366_i32_48 dim 1 : vector<16x384xf32>, i32 -> vector<16x384xf32>
    %c365_i32_49 = arith.constant 365 : i32
    %73 = tpu.dynamic_rotate %64 by %c365_i32_49 dim 1 : vector<16x384xf32>, i32 -> vector<16x384xf32>
    %74 = tpu.concatenate %65, %66, %67, %68, %69, %70, %71, %72, %73 in 0 : vector<16x384xf32>, vector<16x384xf32>, vector<16x384xf32>, vector<16x384xf32>, vector<16x384xf32>, vector<16x384xf32>, vector<16x384xf32>, vector<16x384xf32>, vector<16x384xf32> -> vector<144x384xf32>
    %c0_50 = arith.constant 0 : index
    %c0_51 = arith.constant 0 : index
    %75 = vector.load %arg8[%c0_50, %c0_51] : memref<64x144xbf16, #tpu.memory_space<vmem>>, vector<64x144xbf16>
    %76 = arith.truncf %74 : vector<144x384xf32> to vector<144x384xbf16>
    %cst_52 = arith.constant dense<0.000000e+00> : vector<64x384xf32>
    %77 = tpu.matmul %75, %76, %cst_52 {dimension_numbers = #tpu.dot_dimension_numbers<[1], [0], [0], [1], [0, 0, 1, 1], [], []>} : vector<64x144xbf16>, vector<144x384xbf16>, vector<64x384xf32> -> vector<64x384xf32>
    %78 = arith.truncf %77 : vector<64x384xf32> to vector<64x384xbf16>
    %c0_53 = arith.constant 0 : index
    %c0_54 = arith.constant 0 : index
    %79 = vector.load %arg14[%c0_53, %c0_54] : memref<384x128xbf16, #tpu.memory_space<vmem>>, vector<384x128xbf16>
    %cst_55 = arith.constant dense<0.000000e+00> : vector<64x128xf32>
    %80 = tpu.matmul %78, %79, %cst_55 {dimension_numbers = #tpu.dot_dimension_numbers<[1], [0], [0], [1], [0, 0, 1, 1], [], []>} : vector<64x384xbf16>, vector<384x128xbf16>, vector<64x128xf32> -> vector<64x128xf32>
    %c0_56 = arith.constant 0 : index
    %c0_57 = arith.constant 0 : index
    %81 = vector.load %arg9[%c0_56, %c0_57] : memref<64x1xf32, #tpu.memory_space<vmem>>, vector<64x1xf32>
    %82 = vector.broadcast %81 : vector<64x1xf32> to vector<64x128xf32>
    %83 = arith.addf %80, %82 : vector<64x128xf32>
    %84 = vector.extract_strided_slice %83 {offsets = [0, 0], sizes = [32, 128], strides = [1, 1]} : vector<64x128xf32> to vector<32x128xf32>
    %cst_58 = arith.constant 0.000000e+00 : f32
    %85 = vector.broadcast %cst_58 : f32 to vector<32x128xf32>
    %86 = arith.maximumf %84, %85 : vector<32x128xf32>
    %87 = vector.broadcast %1 : vector<1x128xf32> to vector<32x128xf32>
    %88 = arith.mulf %86, %87 : vector<32x128xf32>
    %89 = vector.extract_strided_slice %83 {offsets = [32, 0], sizes = [32, 128], strides = [1, 1]} : vector<64x128xf32> to vector<32x128xf32>
    %c11_i32 = arith.constant 11 : i32
    %90 = tpu.dynamic_rotate %88 by %c11_i32 dim 1 : vector<32x128xf32>, i32 -> vector<32x128xf32>
    %c10_i32 = arith.constant 10 : i32
    %91 = tpu.dynamic_rotate %88 by %c10_i32 dim 1 : vector<32x128xf32>, i32 -> vector<32x128xf32>
    %c9_i32 = arith.constant 9 : i32
    %92 = tpu.dynamic_rotate %88 by %c9_i32 dim 1 : vector<32x128xf32>, i32 -> vector<32x128xf32>
    %c1_i32_59 = arith.constant 1 : i32
    %93 = tpu.dynamic_rotate %88 by %c1_i32_59 dim 1 : vector<32x128xf32>, i32 -> vector<32x128xf32>
    %c0_i32_60 = arith.constant 0 : i32
    %94 = tpu.dynamic_rotate %88 by %c0_i32_60 dim 1 : vector<32x128xf32>, i32 -> vector<32x128xf32>
    %c127_i32 = arith.constant 127 : i32
    %95 = tpu.dynamic_rotate %88 by %c127_i32 dim 1 : vector<32x128xf32>, i32 -> vector<32x128xf32>
    %c119_i32 = arith.constant 119 : i32
    %96 = tpu.dynamic_rotate %88 by %c119_i32 dim 1 : vector<32x128xf32>, i32 -> vector<32x128xf32>
    %c118_i32 = arith.constant 118 : i32
    %97 = tpu.dynamic_rotate %88 by %c118_i32 dim 1 : vector<32x128xf32>, i32 -> vector<32x128xf32>
    %c117_i32 = arith.constant 117 : i32
    %98 = tpu.dynamic_rotate %88 by %c117_i32 dim 1 : vector<32x128xf32>, i32 -> vector<32x128xf32>
    %99 = tpu.concatenate %90, %91, %92, %93, %94, %95, %96, %97, %98 in 0 : vector<32x128xf32>, vector<32x128xf32>, vector<32x128xf32>, vector<32x128xf32>, vector<32x128xf32>, vector<32x128xf32>, vector<32x128xf32>, vector<32x128xf32>, vector<32x128xf32> -> vector<288x128xf32>
    %c0_61 = arith.constant 0 : index
    %c0_62 = arith.constant 0 : index
    %100 = vector.load %arg10[%c0_61, %c0_62] : memref<32x288xbf16, #tpu.memory_space<vmem>>, vector<32x288xbf16>
    %101 = arith.truncf %99 : vector<288x128xf32> to vector<288x128xbf16>
    %cst_63 = arith.constant dense<0.000000e+00> : vector<32x128xf32>
    %102 = tpu.matmul %100, %101, %cst_63 {dimension_numbers = #tpu.dot_dimension_numbers<[1], [0], [0], [1], [0, 0, 1, 1], [], []>} : vector<32x288xbf16>, vector<288x128xbf16>, vector<32x128xf32> -> vector<32x128xf32>
    %c0_64 = arith.constant 0 : index
    %c0_65 = arith.constant 0 : index
    %103 = vector.load %arg11[%c0_64, %c0_65] : memref<32x1xf32, #tpu.memory_space<vmem>>, vector<32x1xf32>
    %104 = vector.broadcast %103 : vector<32x1xf32> to vector<32x128xf32>
    %105 = arith.addf %102, %104 : vector<32x128xf32>
    %106 = arith.addf %105, %89 : vector<32x128xf32>
    %cst_66 = arith.constant 0.000000e+00 : f32
    %107 = vector.broadcast %cst_66 : f32 to vector<32x128xf32>
    %108 = arith.maximumf %106, %107 : vector<32x128xf32>
    %109 = arith.truncf %108 : vector<32x128xf32> to vector<32x128xbf16>
    %c0_67 = arith.constant 0 : index
    %c0_68 = arith.constant 0 : index
    %110 = vector.load %arg15[%c0_67, %c0_68] : memref<128x16xbf16, #tpu.memory_space<vmem>>, vector<128x16xbf16>
    %cst_69 = arith.constant dense<0.000000e+00> : vector<32x16xf32>
    %111 = tpu.matmul %109, %110, %cst_69 {dimension_numbers = #tpu.dot_dimension_numbers<[1], [0], [0], [1], [0, 0, 1, 1], [], []>} : vector<32x128xbf16>, vector<128x16xbf16>, vector<32x16xf32> -> vector<32x16xf32>
    %c0_70 = arith.constant 0 : index
    %c0_71 = arith.constant 0 : index
    %c0_72 = arith.constant 0 : index
    %112 = vector.load %arg16[%c0_70, %c0_71, %c0_72] : memref<1x32x16xf32, #tpu.memory_space<vmem>>, vector<1x32x16xf32>
    %113 = vector.shape_cast %112 : vector<1x32x16xf32> to vector<32x16xf32>
    %114 = vector.shape_cast %111 : vector<32x16xf32> to vector<1x32x16xf32>
    tpu.vector_store %arg16[%c0_70, %c0_71, %c0_72], %114 {strides = array<i32>} : memref<1x32x16xf32, #tpu.memory_space<vmem>>, vector<1x32x16xf32>,
    return
  }
  func.func @transform_0(%arg0: i32) -> (i32, i32, i32) {
    %c0_i32 = arith.constant 0 : i32
    %c0_i32_0 = arith.constant 0 : i32
    %c0_i32_1 = arith.constant 0 : i32
    return %arg0, %c0_i32, %c0_i32_0 : i32, i32, i32
  }
  func.func @transform_1(%arg0: i32) -> (i32, i32) {
    %c0_i32 = arith.constant 0 : i32
    %c0_i32_0 = arith.constant 0 : i32
    %c0_i32_1 = arith.constant 0 : i32
    return %c0_i32, %c0_i32_0 : i32, i32
  }
  func.func @transform_2(%arg0: i32) -> (i32, i32) {
    %c0_i32 = arith.constant 0 : i32
    %c0_i32_0 = arith.constant 0 : i32
    %c0_i32_1 = arith.constant 0 : i32
    return %c0_i32, %c0_i32_0 : i32, i32
  }
  func.func @transform_3(%arg0: i32) -> (i32, i32) {
    %c0_i32 = arith.constant 0 : i32
    %c0_i32_0 = arith.constant 0 : i32
    %c0_i32_1 = arith.constant 0 : i32
    return %c0_i32, %c0_i32_0 : i32, i32
  }
  func.func @transform_4(%arg0: i32) -> (i32, i32) {
    %c0_i32 = arith.constant 0 : i32
    %c0_i32_0 = arith.constant 0 : i32
    %c0_i32_1 = arith.constant 0 : i32
    return %c0_i32, %c0_i32_0 : i32, i32
  }
  func.func @transform_5(%arg0: i32) -> (i32, i32) {
    %c0_i32 = arith.constant 0 : i32
    %c0_i32_0 = arith.constant 0 : i32
    %c0_i32_1 = arith.constant 0 : i32
    return %c0_i32, %c0_i32_0 : i32, i32
  }
  func.func @transform_6(%arg0: i32) -> (i32, i32) {
    %c0_i32 = arith.constant 0 : i32
    %c0_i32_0 = arith.constant 0 : i32
    %c0_i32_1 = arith.constant 0 : i32
    return %c0_i32, %c0_i32_0 : i32, i32
  }
  func.func @transform_7(%arg0: i32) -> (i32, i32) {
    %c0_i32 = arith.constant 0 : i32
    %c0_i32_0 = arith.constant 0 : i32
    %c0_i32_1 = arith.constant 0 : i32
    return %c0_i32, %c0_i32_0 : i32, i32
  }
  func.func @transform_8(%arg0: i32) -> (i32, i32) {
    %c0_i32 = arith.constant 0 : i32
    %c0_i32_0 = arith.constant 0 : i32
    %c0_i32_1 = arith.constant 0 : i32
    return %c0_i32, %c0_i32_0 : i32, i32
  }
  func.func @transform_9(%arg0: i32) -> (i32, i32) {
    %c0_i32 = arith.constant 0 : i32
    %c0_i32_0 = arith.constant 0 : i32
    %c0_i32_1 = arith.constant 0 : i32
    return %c0_i32, %c0_i32_0 : i32, i32
  }
  func.func @transform_10(%arg0: i32) -> (i32, i32) {
    %c0_i32 = arith.constant 0 : i32
    %c0_i32_0 = arith.constant 0 : i32
    %c0_i32_1 = arith.constant 0 : i32
    return %c0_i32, %c0_i32_0 : i32, i32
  }
  func.func @transform_11(%arg0: i32) -> (i32, i32) {
    %c0_i32 = arith.constant 0 : i32
    %c0_i32_0 = arith.constant 0 : i32
    %c0_i32_1 = arith.constant 0 : i32
    return %c0_i32, %c0_i32_0 : i32, i32
  }
  func.func @transform_12(%arg0: i32) -> (i32, i32) {
    %c0_i32 = arith.constant 0 : i32
    %c0_i32_0 = arith.constant 0 : i32
    %c0_i32_1 = arith.constant 0 : i32
    return %c0_i32, %c0_i32_0 : i32, i32
  }
  func.func @transform_13(%arg0: i32) -> (i32, i32) {
    %c0_i32 = arith.constant 0 : i32
    %c0_i32_0 = arith.constant 0 : i32
    %c0_i32_1 = arith.constant 0 : i32
    return %c0_i32, %c0_i32_0 : i32, i32
  }
  func.func @transform_14(%arg0: i32) -> (i32, i32) {
    %c0_i32 = arith.constant 0 : i32
    %c0_i32_0 = arith.constant 0 : i32
    %c0_i32_1 = arith.constant 0 : i32
    return %c0_i32, %c0_i32_0 : i32, i32
  }
  func.func @transform_15(%arg0: i32) -> (i32, i32, i32) {
    %c0_i32 = arith.constant 0 : i32
    %c0_i32_0 = arith.constant 0 : i32
    %c0_i32_1 = arith.constant 0 : i32
    return %arg0, %c0_i32, %c0_i32_0 : i32, i32, i32
  }
}

</mosaic_0001>

<llo_original>
// kernel: vision_encoder_forward.1
$region0: #{vision_encoder_forward.1}
  #allocation0 [shape = 'u32[]', space=smem, size = 0x4, offset = 0x4, fixed_abs, tag = 'smem constant byte address 0x4 - core index']
  #allocation1 [shape = 'u32[144,128]{1,0:T(1,128)}', space=vmem, size = 0x12000, scoped, tag = 'internal scratch']
  %s0 = inlined_call_operand.vmem [shape: f32[2,8,384], index: 0, kind: input, shape index: {}]
  %s1 = inlined_call_operand.vmem [shape: bf16[16,72], index: 1, kind: input, shape index: {}]
  %s2 = inlined_call_operand.vmem [shape: f32[16,1], index: 2, kind: input, shape index: {}]
  %s3 = inlined_call_operand.vmem [shape: bf16[16,144], index: 3, kind: input, shape index: {}]
  %s4 = inlined_call_operand.vmem [shape: f32[16,1], index: 4, kind: input, shape index: {}]
  %s5 = inlined_call_operand.vmem [shape: bf16[16,144], index: 5, kind: input, shape index: {}]
  %s6 = inlined_call_operand.vmem [shape: f32[16,1], index: 6, kind: input, shape index: {}]
  %s7 = inlined_call_operand.vmem [shape: bf16[64,144], index: 7, kind: input, shape index: {}]
  %s8 = inlined_call_operand.vmem [shape: f32[64,1], index: 8, kind: input, shape index: {}]
  %s9 = inlined_call_operand.vmem [shape: bf16[32,288], index: 9, kind: input, shape index: {}]
  %s10 = inlined_call_operand.vmem [shape: f32[32,1], index: 10, kind: input, shape index: {}]
  %s11 = inlined_call_operand.vmem [shape: f32[1,384], index: 11, kind: input, shape index: {}]
  %s12 = inlined_call_operand.vmem [shape: f32[1,128], index: 12, kind: input, shape index: {}]
  %s13 = inlined_call_operand.vmem [shape: bf16[384,128], index: 13, kind: input, shape index: {}]
  %s14 = inlined_call_operand.vmem [shape: bf16[128,16], index: 14, kind: input, shape index: {}]
  %s15 = inlined_call_operand.vmem [shape: f32[2,32,16], index: 15, kind: output, shape index: {}]
  %s16 = sld [smem:[#allocation0]]
  $region93: #{vision_encoder_forward.1} parent=0
    _
  %s18 = ssub.s32 1, %s16
  %s19 = scalar_select 0, %s18, %s16
  loop: start=0, step=1, limit=4
  $region2: #{vision_encoder_forward.1} parent=0 // loop_pre_header
    _
  $region3: #{vision_encoder_forward.1} parent=0 // loop_header
    %s21 = sphi 0, %s25
    %p22 = scmp.ge.s32.totalorder %s21, 4
    %s31 = sphi 0, %s33
    %s34 = sphi 0, %s31
    %s35 = sphi 0, %s34
    %s51 = sphi 0, %s35
    %s55 = sphi 0, %s55
    %s57 = sphi 0, %s55
    %s58 = sphi 0, %s57
    %s72 = sphi 0, %s58
    %s76 = sphi 0, %s76
    %s78 = sphi 0, %s76
    %s79 = sphi 0, %s78
    %s93 = sphi 0, %s79
    %s97 = sphi 0, %s97
    %s99 = sphi 0, %s97
    %s100 = sphi 0, %s99
    %s114 = sphi 0, %s100
    %s118 = sphi 0, %s118
    %s120 = sphi 0, %s118
    %s121 = sphi 0, %s120
    %s135 = sphi 0, %s121
    %s139 = sphi 0, %s139
    %s141 = sphi 0, %s139
    %s142 = sphi 0, %s141
    %s156 = sphi 0, %s142
    %s160 = sphi 0, %s160
    %s162 = sphi 0, %s160
    %s163 = sphi 0, %s162
    %s177 = sphi 0, %s163
    %s181 = sphi 0, %s181
    %s183 = sphi 0, %s181
    %s184 = sphi 0, %s183
    %s198 = sphi 0, %s184
    %s202 = sphi 0, %s202
    %s204 = sphi 0, %s202
    %s205 = sphi 0, %s204
    %s219 = sphi 0, %s205
    %s223 = sphi 0, %s223
    %s225 = sphi 0, %s223
    %s226 = sphi 0, %s225
    %s240 = sphi 0, %s226
    %s244 = sphi 0, %s244
    %s246 = sphi 0, %s244
    %s247 = sphi 0, %s246
    %s261 = sphi 0, %s247
    %s265 = sphi 0, %s265
    %s267 = sphi 0, %s265
    %s268 = sphi 0, %s267
    %s282 = sphi 0, %s268
    %s286 = sphi 0, %s286
    %s288 = sphi 0, %s286
    %s289 = sphi 0, %s288
    %s303 = sphi 0, %s289
    %s307 = sphi 0, %s307
    %s309 = sphi 0, %s307
    %s310 = sphi 0, %s309
    %s324 = sphi 0, %s310
    %s328 = sphi 0, %s328
    %s330 = sphi 0, %s328
    %s331 = sphi 0, %s330
    %s345 = sphi 0, %s331
    %s351 = sphi 0, %s353
    %s354 = sphi 0, %s351
    %s355 = sphi 0, %s354
    %s371 = sphi 0, %s355
  $region4: #{vision_encoder_forward.1} parent=0 // loop_header_branch
    %24 = sbr.rel (%p22) target = $region8
  $region5: #{vision_encoder_forward.1} parent=0 // loop_body
    %s26 = ssub.s32 %s21, 1
    %s27 = ssub.s32 %s21, 2
    %s28 = sadd.s32 %s21, 1
    %s29 = ssub.s32 %s21, %s28
    %p30 = scmp.eq.s32.totalorder %s29, 0
    %s32 = sadd.s32 %s31, 1
    %s33 = scalar_select %p30, %s31, %s32
    %p36 = pneg %p30
    %p37 = scmp.eq.s32.totalorder %s21, 1
    %p38 = por %p36, %p37
    %p39 = scmp.ne.s32.totalorder %s31, %s34
    %p40 = scmp.eq.s32.totalorder %s21, 0
    %p41 = por %p39, %p40
    %p42 = scmp.ne.s32.totalorder %s31, %s34
    %p43 = scmp.eq.s32.totalorder %s26, 1
    %p44 = por %p42, %p43
    %p45 = scmp.ne.s32.totalorder %s34, %s35
    %p46 = scmp.eq.s32.totalorder %s26, 0
    %p47 = por %p45, %p46
    %p48 = scmp.ne.s32.totalorder %s34, %s35
    %p49 = scmp.eq.s32.totalorder %s27, 1
    %p50 = por %p48, %p49
    %p52 = scmp.ne.s32.totalorder %s35, %s51
    %p53 = scmp.eq.s32.totalorder %s27, 0
    %p54 = por %p52, %p53
    %s56 = sadd.s32 %s55, 1
    %p59 = scmp.eq.s32.totalorder %s21, 1
    %p60 = scmp.ne.s32.totalorder %s55, %s57
    %p61 = scmp.eq.s32.totalorder %s21, 0
    %p62 = por %p60, %p61
    %p63 = scmp.ne.s32.totalorder %s55, %s57
    %p64 = scmp.eq.s32.totalorder %s26, 1
    %p65 = por %p63, %p64
    %p66 = scmp.ne.s32.totalorder %s57, %s58
    %p67 = scmp.eq.s32.totalorder %s26, 0
    %p68 = por %p66, %p67
    %p69 = scmp.ne.s32.totalorder %s57, %s58
    %p70 = scmp.eq.s32.totalorder %s27, 1
    %p71 = por %p69, %p70
    %p73 = scmp.ne.s32.totalorder %s58, %s72
    %p74 = scmp.eq.s32.totalorder %s27, 0
    %p75 = por %p73, %p74
    %s77 = sadd.s32 %s76, 1
    %p80 = scmp.eq.s32.totalorder %s21, 1
    %p81 = scmp.ne.s32.totalorder %s76, %s78
    %p82 = scmp.eq.s32.totalorder %s21, 0
    %p83 = por %p81, %p82
    %p84 = scmp.ne.s32.totalorder %s76, %s78
    %p85 = scmp.eq.s32.totalorder %s26, 1
    %p86 = por %p84, %p85
    %p87 = scmp.ne.s32.totalorder %s78, %s79
    %p88 = scmp.eq.s32.totalorder %s26, 0
    %p89 = por %p87, %p88
    %p90 = scmp.ne.s32.totalorder %s78, %s79
    %p91 = scmp.eq.s32.totalorder %s27, 1
    %p92 = por %p90, %p91
    %p94 = scmp.ne.s32.totalorder %s79, %s93
    %p95 = scmp.eq.s32.totalorder %s27, 0
    %p96 = por %p94, %p95
    %s98 = sadd.s32 %s97, 1
    %p101 = scmp.eq.s32.totalorder %s21, 1
    %p102 = scmp.ne.s32.totalorder %s97, %s99
    %p103 = scmp.eq.s32.totalorder %s21, 0
    %p104 = por %p102, %p103
    %p105 = scmp.ne.s32.totalorder %s97, %s99
    %p106 = scmp.eq.s32.totalorder %s26, 1
    %p107 = por %p105, %p106
    %p108 = scmp.ne.s32.totalorder %s99, %s100
    %p109 = scmp.eq.s32.totalorder %s26, 0
    %p110 = por %p108, %p109
    %p111 = scmp.ne.s32.totalorder %s99, %s100
    %p112 = scmp.eq.s32.totalorder %s27, 1
    %p113 = por %p111, %p112
    %p115 = scmp.ne.s32.totalorder %s100, %s114
    %p116 = scmp.eq.s32.totalorder %s27, 0
    %p117 = por %p115, %p116
    %s119 = sadd.s32 %s118, 1
    %p122 = scmp.eq.s32.totalorder %s21, 1
    %p123 = scmp.ne.s32.totalorder %s118, %s120
    %p124 = scmp.eq.s32.totalorder %s21, 0
    %p125 = por %p123, %p124
    %p126 = scmp.ne.s32.totalorder %s118, %s120
    %p127 = scmp.eq.s32.totalorder %s26, 1
    %p128 = por %p126, %p127
    %p129 = scmp.ne.s32.totalorder %s120, %s121
    %p130 = scmp.eq.s32.totalorder %s26, 0
    %p131 = por %p129, %p130
    %p132 = scmp.ne.s32.totalorder %s120, %s121
    %p133 = scmp.eq.s32.totalorder %s27, 1
    %p134 = por %p132, %p133
    %p136 = scmp.ne.s32.totalorder %s121, %s135
    %p137 = scmp.eq.s32.totalorder %s27, 0
    %p138 = por %p136, %p137
    %s140 = sadd.s32 %s139, 1
    %p143 = scmp.eq.s32.totalorder %s21, 1
    %p144 = scmp.ne.s32.totalorder %s139, %s141
    %p145 = scmp.eq.s32.totalorder %s21, 0
    %p146 = por %p144, %p145
    %p147 = scmp.ne.s32.totalorder %s139, %s141
    %p148 = scmp.eq.s32.totalorder %s26, 1
    %p149 = por %p147, %p148
    %p150 = scmp.ne.s32.totalorder %s141, %s142
    %p151 = scmp.eq.s32.totalorder %s26, 0
    %p152 = por %p150, %p151
    %p153 = scmp.ne.s32.totalorder %s141, %s142
    %p154 = scmp.eq.s32.totalorder %s27, 1
    %p155 = por %p153, %p154
    %p157 = scmp.ne.s32.totalorder %s142, %s156
    %p158 = scmp.eq.s32.totalorder %s27, 0
    %p159 = por %p157, %p158
    %s161 = sadd.s32 %s160, 1
    %p164 = scmp.eq.s32.totalorder %s21, 1
    %p165 = scmp.ne.s32.totalorder %s160, %s162
    %p166 = scmp.eq.s32.totalorder %s21, 0
    %p167 = por %p165, %p166
    %p168 = scmp.ne.s32.totalorder %s160, %s162
    %p169 = scmp.eq.s32.totalorder %s26, 1
    %p170 = por %p168, %p169
    %p171 = scmp.ne.s32.totalorder %s162, %s163
    %p172 = scmp.eq.s32.totalorder %s26, 0
    %p173 = por %p171, %p172
    %p174 = scmp.ne.s32.totalorder %s162, %s163
    %p175 = scmp.eq.s32.totalorder %s27, 1
    %p176 = por %p174, %p175
    %p178 = scmp.ne.s32.totalorder %s163, %s177
    %p179 = scmp.eq.s32.totalorder %s27, 0
    %p180 = por %p178, %p179
    %s182 = sadd.s32 %s181, 1
    %p185 = scmp.eq.s32.totalorder %s21, 1
    %p186 = scmp.ne.s32.totalorder %s181, %s183
    %p187 = scmp.eq.s32.totalorder %s21, 0
    %p188 = por %p186, %p187
    %p189 = scmp.ne.s32.totalorder %s181, %s183
    %p190 = scmp.eq.s32.totalorder %s26, 1
    %p191 = por %p189, %p190
    %p192 = scmp.ne.s32.totalorder %s183, %s184
    %p193 = scmp.eq.s32.totalorder %s26, 0
    %p194 = por %p192, %p193
    %p195 = scmp.ne.s32.totalorder %s183, %s184
    %p196 = scmp.eq.s32.totalorder %s27, 1
    %p197 = por %p195, %p196
    %p199 = scmp.ne.s32.totalorder %s184, %s198
    %p200 = scmp.eq.s32.totalorder %s27, 0
    %p201 = por %p199, %p200
    %s203 = sadd.s32 %s202, 1
    %p206 = scmp.eq.s32.totalorder %s21, 1
    %p207 = scmp.ne.s32.totalorder %s202, %s204
    %p208 = scmp.eq.s32.totalorder %s21, 0
    %p209 = por %p207, %p208
    %p210 = scmp.ne.s32.totalorder %s202, %s204
    %p211 = scmp.eq.s32.totalorder %s26, 1
    %p212 = por %p210, %p211
    %p213 = scmp.ne.s32.totalorder %s204, %s205
    %p214 = scmp.eq.s32.totalorder %s26, 0
    %p215 = por %p213, %p214
    %p216 = scmp.ne.s32.totalorder %s204, %s205
    %p217 = scmp.eq.s32.totalorder %s27, 1
    %p218 = por %p216, %p217
    %p220 = scmp.ne.s32.totalorder %s205, %s219
    %p221 = scmp.eq.s32.totalorder %s27, 0
    %p222 = por %p220, %p221
    %s224 = sadd.s32 %s223, 1
    %p227 = scmp.eq.s32.totalorder %s21, 1
    %p228 = scmp.ne.s32.totalorder %s223, %s225
    %p229 = scmp.eq.s32.totalorder %s21, 0
    %p230 = por %p228, %p229
    %p231 = scmp.ne.s32.totalorder %s223, %s225
    %p232 = scmp.eq.s32.totalorder %s26, 1
    %p233 = por %p231, %p232
    %p234 = scmp.ne.s32.totalorder %s225, %s226
    %p235 = scmp.eq.s32.totalorder %s26, 0
    %p236 = por %p234, %p235
    %p237 = scmp.ne.s32.totalorder %s225, %s226
    %p238 = scmp.eq.s32.totalorder %s27, 1
    %p239 = por %p237, %p238
    %p241 = scmp.ne.s32.totalorder %s226, %s240
    %p242 = scmp.eq.s32.totalorder %s27, 0
    %p243 = por %p241, %p242
    %s245 = sadd.s32 %s244, 1
    %p248 = scmp.eq.s32.totalorder %s21, 1
    %p249 = scmp.ne.s32.totalorder %s244, %s246
    %p250 = scmp.eq.s32.totalorder %s21, 0
    %p251 = por %p249, %p250
    %p252 = scmp.ne.s32.totalorder %s244, %s246
    %p253 = scmp.eq.s32.totalorder %s26, 1
    %p254 = por %p252, %p253
    %p255 = scmp.ne.s32.totalorder %s246, %s247
    %p256 = scmp.eq.s32.totalorder %s26, 0
    %p257 = por %p255, %p256
    %p258 = scmp.ne.s32.totalorder %s246, %s247
    %p259 = scmp.eq.s32.totalorder %s27, 1
    %p260 = por %p258, %p259
    %p262 = scmp.ne.s32.totalorder %s247, %s261
    %p263 = scmp.eq.s32.totalorder %s27, 0
    %p264 = por %p262, %p263
    %s266 = sadd.s32 %s265, 1
    %p269 = scmp.eq.s32.totalorder %s21, 1
    %p270 = scmp.ne.s32.totalorder %s265, %s267
    %p271 = scmp.eq.s32.totalorder %s21, 0
    %p272 = por %p270, %p271
    %p273 = scmp.ne.s32.totalorder %s265, %s267
    %p274 = scmp.eq.s32.totalorder %s26, 1
    %p275 = por %p273, %p274
    %p276 = scmp.ne.s32.totalorder %s267, %s268
    %p277 = scmp.eq.s32.totalorder %s26, 0
    %p278 = por %p276, %p277
    %p279 = scmp.ne.s32.totalorder %s267, %s268
    %p280 = scmp.eq.s32.totalorder %s27, 1
    %p281 = por %p279, %p280
    %p283 = scmp.ne.s32.totalorder %s268, %s282
    %p284 = scmp.eq.s32.totalorder %s27, 0
    %p285 = por %p283, %p284
    %s287 = sadd.s32 %s286, 1
    %p290 = scmp.eq.s32.totalorder %s21, 1
    %p291 = scmp.ne.s32.totalorder %s286, %s288
    %p292 = scmp.eq.s32.totalorder %s21, 0
    %p293 = por %p291, %p292
    %p294 = scmp.ne.s32.totalorder %s286, %s288
    %p295 = scmp.eq.s32.totalorder %s26, 1
    %p296 = por %p294, %p295
    %p297 = scmp.ne.s32.totalorder %s288, %s289
    %p298 = scmp.eq.s32.totalorder %s26, 0
    %p299 = por %p297, %p298
    %p300 = scmp.ne.s32.totalorder %s288, %s289
    %p301 = scmp.eq.s32.totalorder %s27, 1
    %p302 = por %p300, %p301
    %p304 = scmp.ne.s32.totalorder %s289, %s303
    %p305 = scmp.eq.s32.totalorder %s27, 0
    %p306 = por %p304, %p305
    %s308 = sadd.s32 %s307, 1
    %p311 = scmp.eq.s32.totalorder %s21, 1
    %p312 = scmp.ne.s32.totalorder %s307, %s309
    %p313 = scmp.eq.s32.totalorder %s21, 0
    %p314 = por %p312, %p313
    %p315 = scmp.ne.s32.totalorder %s307, %s309
    %p316 = scmp.eq.s32.totalorder %s26, 1
    %p317 = por %p315, %p316
    %p318 = scmp.ne.s32.totalorder %s309, %s310
    %p319 = scmp.eq.s32.totalorder %s26, 0
    %p320 = por %p318, %p319
    %p321 = scmp.ne.s32.totalorder %s309, %s310
    %p322 = scmp.eq.s32.totalorder %s27, 1
    %p323 = por %p321, %p322
    %p325 = scmp.ne.s32.totalorder %s310, %s324
    %p326 = scmp.eq.s32.totalorder %s27, 0
    %p327 = por %p325, %p326
    %s329 = sadd.s32 %s328, 1
    %p332 = scmp.eq.s32.totalorder %s21, 1
    %p333 = scmp.ne.s32.totalorder %s328, %s330
    %p334 = scmp.eq.s32.totalorder %s21, 0
    %p335 = por %p333, %p334
    %p336 = scmp.ne.s32.totalorder %s328, %s330
    %p337 = scmp.eq.s32.totalorder %s26, 1
    %p338 = por %p336, %p337
    %p339 = scmp.ne.s32.totalorder %s330, %s331
    %p340 = scmp.eq.s32.totalorder %s26, 0
    %p341 = por %p339, %p340
    %p342 = scmp.ne.s32.totalorder %s330, %s331
    %p343 = scmp.eq.s32.totalorder %s27, 1
    %p344 = por %p342, %p343
    %p346 = scmp.ne.s32.totalorder %s331, %s345
    %p347 = scmp.eq.s32.totalorder %s27, 0
    %p348 = por %p346, %p347
    %s349 = ssub.s32 %s21, %s28
    %p350 = scmp.eq.s32.totalorder %s349, 0
    %s352 = sadd.s32 %s351, 1
    %s353 = scalar_select %p350, %s351, %s352
    %p356 = pneg %p350
    %p357 = scmp.eq.s32.totalorder %s21, 1
    %p358 = por %p356, %p357
    %p359 = scmp.ne.s32.totalorder %s351, %s354
    %p360 = scmp.eq.s32.totalorder %s21, 0
    %p361 = por %p359, %p360
    %p362 = scmp.ne.s32.totalorder %s351, %s354
    %p363 = scmp.eq.s32.totalorder %s26, 1
    %p364 = por %p362, %p363
    %p365 = scmp.ne.s32.totalorder %s354, %s355
    %p366 = scmp.eq.s32.totalorder %s26, 0
    %p367 = por %p365, %p366
    %p368 = scmp.ne.s32.totalorder %s354, %s355
    %p369 = scmp.eq.s32.totalorder %s27, 1
    %p370 = por %p368, %p369
    %p372 = scmp.ne.s32.totalorder %s355, %s371
    %p373 = scmp.eq.s32.totalorder %s27, 0
    %p374 = por %p372, %p373
    %p375 = scmp.le.s32.totalorder 1, %s21
    %p376 = scmp.lt.s32.totalorder %s21, 3
    %p377 = pnand %p375, %p376
    %p378 = pneg %p377
    // Predicated region
    $region9: #{vision_encoder_forward.1} parent=5 // pred_check
      _
    $region10: #{vision_encoder_forward.1} parent=5 // pred_check_branch
      %380 = sbr.rel (%p377) target = $region12
    $region11: #{vision_encoder_forward.1} parent=5 // pred_region
      %s381 = ssub.s32 %s21, 1
      // Predicated region
      $region13: #{vision_encoder_forward.1} parent=11 // pred_check
        %p382 = pneg %p68
      $region14: #{vision_encoder_forward.1} parent=11 // pred_check_branch
        %384 = sbr.rel (%p382) target = $region16
      $region15: #{vision_encoder_forward.1} parent=11 // pred_region
        _
      $region16: #{vision_encoder_forward.1} parent=11 // pred_fallthru
        _
      // Predicated region
      $region17: #{vision_encoder_forward.1} parent=11 // pred_check
        %p385 = pneg %p89
      $region18: #{vision_encoder_forward.1} parent=11 // pred_check_branch
        %387 = sbr.rel (%p385) target = $region20
      $region19: #{vision_encoder_forward.1} parent=11 // pred_region
        _
      $region20: #{vision_encoder_forward.1} parent=11 // pred_fallthru
        _
      // Predicated region
      $region21: #{vision_encoder_forward.1} parent=11 // pred_check
        %p388 = pneg %p110
      $region22: #{vision_encoder_forward.1} parent=11 // pred_check_branch
        %390 = sbr.rel (%p388) target = $region24
      $region23: #{vision_encoder_forward.1} parent=11 // pred_region
        _
      $region24: #{vision_encoder_forward.1} parent=11 // pred_fallthru
        _
      // Predicated region
      $region25: #{vision_encoder_forward.1} parent=11 // pred_check
        %p391 = pneg %p131
      $region26: #{vision_encoder_forward.1} parent=11 // pred_check_branch
        %393 = sbr.rel (%p391) target = $region28
      $region27: #{vision_encoder_forward.1} parent=11 // pred_region
        _
      $region28: #{vision_encoder_forward.1} parent=11 // pred_fallthru
        _
      // Predicated region
      $region29: #{vision_encoder_forward.1} parent=11 // pred_check
        %p394 = pneg %p152
      $region30: #{vision_encoder_forward.1} parent=11 // pred_check_branch
        %396 = sbr.rel (%p394) target = $region32
      $region31: #{vision_encoder_forward.1} parent=11 // pred_region
        _
      $region32: #{vision_encoder_forward.1} parent=11 // pred_fallthru
        _
      // Predicated region
      $region33: #{vision_encoder_forward.1} parent=11 // pred_check
        %p397 = pneg %p173
      $region34: #{vision_encoder_forward.1} parent=11 // pred_check_branch
        %399 = sbr.rel (%p397) target = $region36
      $region35: #{vision_encoder_forward.1} parent=11 // pred_region
        _
      $region36: #{vision_encoder_forward.1} parent=11 // pred_fallthru
        _
      // Predicated region
      $region37: #{vision_encoder_forward.1} parent=11 // pred_check
        %p400 = pneg %p194
      $region38: #{vision_encoder_forward.1} parent=11 // pred_check_branch
        %402 = sbr.rel (%p400) target = $region40
      $region39: #{vision_encoder_forward.1} parent=11 // pred_region
        _
      $region40: #{vision_encoder_forward.1} parent=11 // pred_fallthru
        _
      // Predicated region
      $region41: #{vision_encoder_forward.1} parent=11 // pred_check
        %p403 = pneg %p215
      $region42: #{vision_encoder_forward.1} parent=11 // pred_check_branch
        %405 = sbr.rel (%p403) target = $region44
      $region43: #{vision_encoder_forward.1} parent=11 // pred_region
        _
      $region44: #{vision_encoder_forward.1} parent=11 // pred_fallthru
        _
      // Predicated region
      $region45: #{vision_encoder_forward.1} parent=11 // pred_check
        %p406 = pneg %p236
      $region46: #{vision_encoder_forward.1} parent=11 // pred_check_branch
        %408 = sbr.rel (%p406) target = $region48
      $region47: #{vision_encoder_forward.1} parent=11 // pred_region
        _
      $region48: #{vision_encoder_forward.1} parent=11 // pred_fallthru
        _
      // Predicated region
      $region49: #{vision_encoder_forward.1} parent=11 // pred_check
        %p409 = pneg %p257
      $region50: #{vision_encoder_forward.1} parent=11 // pred_check_branch
        %411 = sbr.rel (%p409) target = $region52
      $region51: #{vision_encoder_forward.1} parent=11 // pred_region
        _
      $region52: #{vision_encoder_forward.1} parent=11 // pred_fallthru
        _
      // Predicated region
      $region53: #{vision_encoder_forward.1} parent=11 // pred_check
        %p412 = pneg %p278
      $region54: #{vision_encoder_forward.1} parent=11 // pred_check_branch
        %414 = sbr.rel (%p412) target = $region56
      $region55: #{vision_encoder_forward.1} parent=11 // pred_region
        _
      $region56: #{vision_encoder_forward.1} parent=11 // pred_fallthru
        _
      // Predicated region
      $region57: #{vision_encoder_forward.1} parent=11 // pred_check
        %p415 = pneg %p299
      $region58: #{vision_encoder_forward.1} parent=11 // pred_check_branch
        %417 = sbr.rel (%p415) target = $region60
      $region59: #{vision_encoder_forward.1} parent=11 // pred_region
        _
      $region60: #{vision_encoder_forward.1} parent=11 // pred_fallthru
        _
      // Predicated region
      $region61: #{vision_encoder_forward.1} parent=11 // pred_check
        %p418 = pneg %p320
      $region62: #{vision_encoder_forward.1} parent=11 // pred_check_branch
        %420 = sbr.rel (%p418) target = $region64
      $region63: #{vision_encoder_forward.1} parent=11 // pred_region
        _
      $region64: #{vision_encoder_forward.1} parent=11 // pred_fallthru
        _
      // Predicated region
      $region65: #{vision_encoder_forward.1} parent=11 // pred_check
        %p421 = pneg %p341
      $region66: #{vision_encoder_forward.1} parent=11 // pred_check_branch
        %423 = sbr.rel (%p421) target = $region68
      $region67: #{vision_encoder_forward.1} parent=11 // pred_region
        _
      $region68: #{vision_encoder_forward.1} parent=11 // pred_fallthru
        _
    $region12: #{vision_encoder_forward.1} parent=5 // pred_fallthru
      _
    %p424 = scmp.lt.s32.totalorder %s21, 2
    // Predicated region
    $region69: #{vision_encoder_forward.1} parent=5 // pred_check
      %p425 = pneg %p424
    $region70: #{vision_encoder_forward.1} parent=5 // pred_check_branch
      %427 = sbr.rel (%p425) target = $region72
    $region71: #{vision_encoder_forward.1} parent=5 // pred_region
      // Predicated region
      $region73: #{vision_encoder_forward.1} parent=71 // pred_check
        %p428 = pneg %p41
      $region74: #{vision_encoder_forward.1} parent=71 // pred_check_branch
        %430 = sbr.rel (%p428) target = $region76
      $region75: #{vision_encoder_forward.1} parent=71 // pred_region
        %p431 = scmp.lt.s32.totalorder %s21, 1
        %s432 = scalar_select %p431, %s21, 1
        %s433 = smul.addr %s432, 3
        %s434 = smul.addr %s433, 8
        %s435 = scalar_lea.vmem %s0, %s434
      $region76: #{vision_encoder_forward.1} parent=71 // pred_fallthru
        _
    $region72: #{vision_encoder_forward.1} parent=5 // pred_fallthru
      _
    %p436 = scmp.le.s32.totalorder 1, %s21
    %p437 = scmp.lt.s32.totalorder %s21, 3
    %p438 = pnand %p436, %p437
    %p439 = pneg %p438
    // Predicated region
    $region77: #{vision_encoder_forward.1} parent=5 // pred_check
      _
    $region78: #{vision_encoder_forward.1} parent=5 // pred_check_branch
      %441 = sbr.rel (%p438) target = $region80
    $region79: #{vision_encoder_forward.1} parent=5 // pred_region
      %s442 = ssub.s32 %s21, 1
      %p443 = scmp.lt.s32.totalorder %s26, 1
      %s444 = scalar_select %p443, %s26, 1
      %s445 = smul.addr %s444, 3
      %s446 = smul.addr %s445, 8
      %s447 = scalar_lea.vmem %s0, %s446
      %p448 = pneg %p47
      %p449 = pneg %p44
      %p450 = pneg %p68
      %p451 = pneg %p65
      %p452 = pneg %p89
      %p453 = pneg %p86
      %p454 = pneg %p110
      %p455 = pneg %p107
      %p456 = pneg %p131
      %p457 = pneg %p128
      %p458 = pneg %p152
      %p459 = pneg %p149
      %p460 = pneg %p173
      %p461 = pneg %p170
      %p462 = pneg %p194
      %p463 = pneg %p191
      %p464 = pneg %p215
      %p465 = pneg %p212
      %p466 = pneg %p236
      %p467 = pneg %p233
      %p468 = pneg %p257
      %p469 = pneg %p254
      %p470 = pneg %p278
      %p471 = pneg %p275
      %p472 = pneg %p299
      %p473 = pneg %p296
      %p474 = pneg %p320
      %p475 = pneg %p317
      %p476 = pneg %p341
      %p477 = pneg %p338
      %p478 = pneg %p367
      %p479 = pneg %p364
      %p480 = scmp.lt.s32.totalorder %s26, 1
      %s481 = scalar_select %p480, %s26, 1
      %s482 = smul.addr %s481, 4
      %s483 = smul.addr %s482, 8
      %s484 = scalar_lea.vmem %s15, %s483
      %p485 = scmp.lt.s32.totalorder %s26, 1
      %s486 = scalar_select %p485, %s26, 1
      %s487 = smul.addr %s486, 3
      %s488 = smul.addr %s487, 8
      %s489 = scalar_lea.vmem %s0, %s488
      %p490 = scmp.lt.s32.totalorder %s26, 1
      %s491 = scalar_select %p490, %s26, 1
      %s492 = smul.addr %s491, 4
      %s493 = smul.addr %s492, 8
      %s494 = scalar_lea.vmem %s15, %s493
      %v496 = vld [vmem:[%s11] sm:$0x7]
      %v497 = vld [vmem:[%s12] sm:$0x1]
      %v498 = vld [vmem:[%s489] sm:$0xff]
      %v499 = vld [vmem:[%s489 + $0x8] sm:$0xff]
      %v500 = vld [vmem:[%s489 + $0x10] sm:$0xff]
      %501 = vrot.lane.b32.xlu0 %v498, 19
      %v502 = vpop.permute.xlu0 %501
      %503 = vrot.lane.b32.xlu0 %v499, 19
      %v504 = vpop.permute.xlu0 %503
      %505 = vrot.lane.b32.xlu0 %v500, 19
      %v506 = vpop.permute.xlu0 %505
      %v507 = vlaneseq
      %v508 = vand.u32 %v507, 127
      %vm509 = vcmp.lt.s32.totalorder %v508, 19
      %v510 = vsel %vm509, %v504, %v506
      %v511 = vsel %vm509, %v502, %v504
      %v512 = vsel %vm509, %v506, %v502
      %513 = vrot.lane.b32.xlu0 %v498, 18
      %v514 = vpop.permute.xlu0 %513
      %515 = vrot.lane.b32.xlu0 %v499, 18
      %v516 = vpop.permute.xlu0 %515
      %517 = vrot.lane.b32.xlu0 %v500, 18
      %v518 = vpop.permute.xlu0 %517
      %vm519 = vcmp.lt.s32.totalorder %v508, 18
      %v520 = vsel %vm519, %v516, %v518
      %v521 = vsel %vm519, %v514, %v516
      %v522 = vsel %vm519, %v518, %v514
      %523 = vrot.lane.b32.xlu0 %v498, 17
      %v524 = vpop.permute.xlu0 %523
      %525 = vrot.lane.b32.xlu0 %v499, 17
      %v526 = vpop.permute.xlu0 %525
      %527 = vrot.lane.b32.xlu0 %v500, 17
      %v528 = vpop.permute.xlu0 %527
      %vm529 = vcmp.lt.s32.totalorder %v508, 17
      %v530 = vsel %vm529, %v526, %v528
      %v531 = vsel %vm529, %v524, %v526
      %v532 = vsel %vm529, %v528, %v524
      %533 = vrot.lane.b32.xlu0 %v498, 1
      %v534 = vpop.permute.xlu0 %533
      %535 = vrot.lane.b32.xlu0 %v499, 1
      %v536 = vpop.permute.xlu0 %535
      %537 = vrot.lane.b32.xlu0 %v500, 1
      %v538 = vpop.permute.xlu0 %537
      %vm539 = vcmp.lt.s32.totalorder %v508, 1
      %v540 = vsel %vm539, %v536, %v538
      %v541 = vsel %vm539, %v534, %v536
      %v542 = vsel %vm539, %v538, %v534
      %543 = vrot.lane.b32.xlu0 %v498, 127
      %v544 = vpop.permute.xlu0 %543
      %545 = vrot.lane.b32.xlu0 %v499, 127
      %v546 = vpop.permute.xlu0 %545
      %547 = vrot.lane.b32.xlu0 %v500, 127
      %v548 = vpop.permute.xlu0 %547
      %vm549 = vcmp.lt.s32.totalorder %v508, 127
      %v550 = vsel %vm549, %v546, %v548
      %v551 = vsel %vm549, %v544, %v546
      %v552 = vsel %vm549, %v548, %v544
      %553 = vrot.lane.b32.xlu0 %v498, 111
      %v554 = vpop.permute.xlu0 %553
      %555 = vrot.lane.b32.xlu0 %v499, 111
      %v556 = vpop.permute.xlu0 %555
      %557 = vrot.lane.b32.xlu0 %v500, 111
      %v558 = vpop.permute.xlu0 %557
      %vm559 = vcmp.lt.s32.totalorder %v508, 111
      %v560 = vsel %vm559, %v556, %v558
      %v561 = vsel %vm559, %v554, %v556
      %v562 = vsel %vm559, %v558, %v554
      %563 = vrot.lane.b32.xlu0 %v498, 110
      %v564 = vpop.permute.xlu0 %563
      %565 = vrot.lane.b32.xlu0 %v499, 110
      %v566 = vpop.permute.xlu0 %565
      %567 = vrot.lane.b32.xlu0 %v500, 110
      %v568 = vpop.permute.xlu0 %567
      %vm569 = vcmp.lt.s32.totalorder %v508, 110
      %v570 = vsel %vm569, %v566, %v568
      %v571 = vsel %vm569, %v564, %v566
      %v572 = vsel %vm569, %v568, %v564
      %573 = vrot.lane.b32.xlu0 %v498, 109
      %v574 = vpop.permute.xlu0 %573
      %575 = vrot.lane.b32.xlu0 %v499, 109
      %v576 = vpop.permute.xlu0 %575
      %577 = vrot.lane.b32.xlu0 %v500, 109
      %v578 = vpop.permute.xlu0 %577
      %vm579 = vcmp.lt.s32.totalorder %v508, 109
      %v580 = vsel %vm579, %v576, %v578
      %v581 = vsel %vm579, %v574, %v576
      %v582 = vsel %vm579, %v578, %v574
      %v583 = vld [vmem:[%s1] sm:$0xf]
      %v584 = vld [vmem:[%s1 + $0x4] sm:$0xf]
      %v585 = vpack.c.bf16 %v522, %v512
      %v586 = vpack.c.bf16 %v521, %v511
      %v587 = vpack.c.bf16 %v520, %v510
      %v588 = vpack.c.bf16 %v542, %v532
      %v589 = vpack.c.bf16 %v541, %v531
      %v590 = vpack.c.bf16 %v540, %v530
      %v591 = vpack.c.bf16 %v551, %v498
      %v592 = vpack.c.bf16 %v550, %v499
      %v593 = vpack.c.bf16 %v552, %v500
      %v594 = vpack.c.bf16 %v571, %v561
      %v595 = vpack.c.bf16 %v570, %v560
      %v596 = vpack.c.bf16 %v572, %v562
      %v597 = vpack.c.bf16 %v581, %v581
      %v598 = vpack.c.bf16 %v580, %v580
      %v599 = vpack.c.bf16 %v582, %v582
      %v600 = vld [vmem:[%s2] sm:$0xff]
      %v601 = vld [vmem:[%s2 + $0x8] sm:$0xff]
      %603 = vset.pattern.permute.xlu0 0
      %604 = vperm.xlu0 %603, %v600
      %v605 = vpop.permute.xlu0 %604
      %608 = vset.pattern.permute.xlu0 0
      %609 = vperm.xlu0 %608, %v601
      %v610 = vpop.permute.xlu0 %609
      %v614 = vunpack.c.l.b16 %v583
      %v615 = vunpack.c.l.b16 %v584
      %v616 = vpack.c.b16 %v615, %v614
      %vm617 = vcmask 588800
      %v619 = vsel %vm617, %v616, 0
      %vm621 = vcmask 1043456
      %v623 = vsel %vm621, %v597, 0
      %v626 = vsel %vm621, %v598, 0
      %v629 = vsel %vm621, %v599, 0
      %631 = vmatprep.subr.bf16.mxu0 %v586
      %632 = vmatpush1.bf16.msra.mxu0 %v585
      %633 = vmatprep.subr.bf16.mxu0 %v589
      %634 = vmatpush1.bf16.msra.mxu0 %v588
      %635 = vmatprep.subr.bf16.mxu0 %v592
      %636 = vmatpush1.bf16.msra.mxu0 %v591
      %637 = vmatprep.subr.bf16.mxu0 %v595
      %638 = vmatpush1.bf16.msra.mxu0 %v594
      %639 = vmatprep.subr.bf16.mxu0 %v626
      %640 = vmatpush1.bf16.msra.mxu0 %v623
      %641 = vmatprep.subr.bf16.mxu0 0
      %642 = vmatpush1.bf16.msra.mxu0 0
      %643 = vmatprep.subr.bf16.mxu0 0
      %644 = vmatpush1.bf16.msra.mxu0 0
      %645 = vmatprep.subr.bf16.mxu0 0
      %646 = vmatpush1.bf16.msra.mxu0 0
      %647 = vmatprep.subr.bf16.mxu0 0
      %648 = vmatpush1.bf16.msra.mxu0 0
      %649 = vmatprep.subr.bf16.mxu0 0
      %650 = vmatpush1.bf16.msra.mxu0 0
      %651 = vmatprep.subr.bf16.mxu0 0
      %652 = vmatpush1.bf16.msra.mxu0 0
      %653 = vmatprep.subr.bf16.mxu0 0
      %654 = vmatpush1.bf16.msra.mxu0 0
      %655 = vmatprep.subr.bf16.mxu0 0
      %656 = vmatpush1.bf16.msra.mxu0 0
      %657 = vmatprep.subr.bf16.mxu0 0
      %658 = vmatpush1.bf16.msra.mxu0 0
      %659 = vmatprep.subr.bf16.mxu0 0
      %660 = vmatpush1.bf16.msra.mxu0 0
      %661 = vmatprep.subr.bf16.mxu0 0
      %662 = vmatpush1.bf16.msra.mxu0 0
      %663 = vmatprep.mubr.bf16.mxu0 0
      %664 = vmatmul.mubr.bf16.gmra.mrb[0].mxu0 %v619
      %v665 = vpop.f32.mrb[0].mxu0
      %v666 = vadd.f32 %v605, %v665
      %v667 = vpop.f32.mrb[0].mxu0
      %v668 = vadd.f32 %v605, %v667
      %v669 = vpop.f32.mrb[0].mxu0
      %v670 = vadd.f32 %v610, %v669
      %v671 = vpop.f32.mrb[0].mxu0
      %v672 = vadd.f32 %v610, %v671
      %673 = vdwg.mxu0
      %674 = vmatprep.subr.bf16.mxu0 0
      %675 = vmatpush1.bf16.msra.mxu0 %v587
      %676 = vmatprep.subr.bf16.mxu0 0
      %677 = vmatpush1.bf16.msra.mxu0 %v590
      %678 = vmatprep.subr.bf16.mxu0 0
      %679 = vmatpush1.bf16.msra.mxu0 %v593
      %680 = vmatprep.subr.bf16.mxu0 0
      %681 = vmatpush1.bf16.msra.mxu0 %v596
      %682 = vmatprep.subr.bf16.mxu0 0
      %683 = vmatpush1.bf16.msra.mxu0 %v629
      %684 = vmatprep.subr.bf16.mxu0 0
      %685 = vmatpush1.bf16.msra.mxu0 0
      %686 = vmatprep.subr.bf16.mxu0 0
      %687 = vmatpush1.bf16.msra.mxu0 0
      %688 = vmatprep.subr.bf16.mxu0 0
      %689 = vmatpush1.bf16.msra.mxu0 0
      %690 = vmatprep.subr.bf16.mxu0 0
      %691 = vmatpush1.bf16.msra.mxu0 0
      %692 = vmatprep.subr.bf16.mxu0 0
      %693 = vmatpush1.bf16.msra.mxu0 0
      %694 = vmatprep.subr.bf16.mxu0 0
      %695 = vmatpush1.bf16.msra.mxu0 0
      %696 = vmatprep.subr.bf16.mxu0 0
      %697 = vmatpush1.bf16.msra.mxu0 0
      %698 = vmatprep.subr.bf16.mxu0 0
      %699 = vmatpush1.bf16.msra.mxu0 0
      %700 = vmatprep.subr.bf16.mxu0 0
      %701 = vmatpush1.bf16.msra.mxu0 0
      %702 = vmatprep.subr.bf16.mxu0 0
      %703 = vmatpush1.bf16.msra.mxu0 0
      %704 = vmatprep.subr.bf16.mxu0 0
      %705 = vmatpush1.bf16.msra.mxu0 0
      %706 = vmatprep.mubr.bf16.mxu0 0
      %707 = vmatmul.mubr.bf16.gmra.mrb[0].mxu0 %v619
      %v708 = vpop.f32.mrb[0].mxu0
      %v709 = vadd.f32 %v605, %v708
      %v710 = vpop.f32.mrb[0].mxu0
      %v711 = vpop.f32.mrb[0].mxu0
      %v712 = vadd.f32 %v610, %v711
      %v713 = vpop.f32.mrb[0].mxu0
      %714 = vdwg.mxu0
      %v715 = vmax.f32 %v666, 0.0
      %v716 = vmax.f32 %v668, 0.0
      %v717 = vmax.f32 %v709, 0.0
      %v718 = vmax.f32 %v670, 0.0
      %v719 = vmax.f32 %v672, 0.0
      %v720 = vmax.f32 %v712, 0.0
      %v722 = vlaneseq
      %v723 = vshrl.u32 %v722, 7
      %v724 = vsub.s32 0, %v723
      %v725 = vrot.slane %v496, %v724
      %v726 = vlaneseq
      %v727 = vshrl.u32 %v726, 7
      %v728 = vsub.s32 1, %v727
      %v729 = vrot.slane %v496, %v728
      %v730 = vlaneseq
      %v731 = vshrl.u32 %v730, 7
      %v732 = vsub.s32 2, %v731
      %v733 = vrot.slane %v496, %v732
      %v737 = vmul.f32 %v715, %v725
      %v738 = vmul.f32 %v716, %v729
      %v739 = vmul.f32 %v717, %v733
      %v740 = vmul.f32 %v718, %v725
      %v741 = vmul.f32 %v719, %v729
      %v742 = vmul.f32 %v720, %v733
      %743 = vrot.lane.b32.xlu0 %v737, 19
      %v744 = vpop.permute.xlu0 %743
      %745 = vrot.lane.b32.xlu0 %v740, 19
      %v746 = vpop.permute.xlu0 %745
      %747 = vrot.lane.b32.xlu0 %v738, 19
      %v748 = vpop.permute.xlu0 %747
      %749 = vrot.lane.b32.xlu0 %v741, 19
      %v750 = vpop.permute.xlu0 %749
      %751 = vrot.lane.b32.xlu0 %v739, 19
      %v752 = vpop.permute.xlu0 %751
      %753 = vrot.lane.b32.xlu0 %v742, 19
      %v754 = vpop.permute.xlu0 %753
      %v755 = vsel %vm509, %v748, %v752
      %v756 = vsel %vm509, %v750, %v754
      %v757 = vsel %vm509, %v744, %v748
      %v758 = vsel %vm509, %v746, %v750
      %v759 = vsel %vm509, %v752, %v744
      %v760 = vsel %vm509, %v754, %v746
      %761 = vrot.lane.b32.xlu0 %v737, 18
      %v762 = vpop.permute.xlu0 %761
      %763 = vrot.lane.b32.xlu0 %v740, 18
      %v764 = vpop.permute.xlu0 %763
      %765 = vrot.lane.b32.xlu0 %v738, 18
      %v766 = vpop.permute.xlu0 %765
      %767 = vrot.lane.b32.xlu0 %v741, 18
      %v768 = vpop.permute.xlu0 %767
      %769 = vrot.lane.b32.xlu0 %v739, 18
      %v770 = vpop.permute.xlu0 %769
      %771 = vrot.lane.b32.xlu0 %v742, 18
      %v772 = vpop.permute.xlu0 %771
      %v773 = vsel %vm519, %v766, %v770
      %v774 = vsel %vm519, %v768, %v772
      %v775 = vsel %vm519, %v762, %v766
      %v776 = vsel %vm519, %v764, %v768
      %v777 = vsel %vm519, %v770, %v762
      %v778 = vsel %vm519, %v772, %v764
      %779 = vrot.lane.b32.xlu0 %v737, 17
      %v780 = vpop.permute.xlu0 %779
      %781 = vrot.lane.b32.xlu0 %v740, 17
      %v782 = vpop.permute.xlu0 %781
      %783 = vrot.lane.b32.xlu0 %v738, 17
      %v784 = vpop.permute.xlu0 %783
      %785 = vrot.lane.b32.xlu0 %v741, 17
      %v786 = vpop.permute.xlu0 %785
      %787 = vrot.lane.b32.xlu0 %v739, 17
      %v788 = vpop.permute.xlu0 %787
      %789 = vrot.lane.b32.xlu0 %v742, 17
      %v790 = vpop.permute.xlu0 %789
      %v791 = vsel %vm529, %v784, %v788
      %v792 = vsel %vm529, %v786, %v790
      %v793 = vsel %vm529, %v780, %v784
      %v794 = vsel %vm529, %v782, %v786
      %v795 = vsel %vm529, %v788, %v780
      %v796 = vsel %vm529, %v790, %v782
      %797 = vrot.lane.b32.xlu0 %v737, 1
      %v798 = vpop.permute.xlu0 %797
      %799 = vrot.lane.b32.xlu0 %v740, 1
      %v800 = vpop.permute.xlu0 %799
      %801 = vrot.lane.b32.xlu0 %v738, 1
      %v802 = vpop.permute.xlu0 %801
      %803 = vrot.lane.b32.xlu0 %v741, 1
      %v804 = vpop.permute.xlu0 %803
      %805 = vrot.lane.b32.xlu0 %v739, 1
      %v806 = vpop.permute.xlu0 %805
      %807 = vrot.lane.b32.xlu0 %v742, 1
      %v808 = vpop.permute.xlu0 %807
      %v809 = vsel %vm539, %v802, %v806
      %v810 = vsel %vm539, %v804, %v808
      %v811 = vsel %vm539, %v798, %v802
      %v812 = vsel %vm539, %v800, %v804
      %v813 = vsel %vm539, %v806, %v798
      %v814 = vsel %vm539, %v808, %v800
      %815 = vrot.lane.b32.xlu0 %v737, 127
      %v816 = vpop.permute.xlu0 %815
      %817 = vrot.lane.b32.xlu0 %v740, 127
      %v818 = vpop.permute.xlu0 %817
      %819 = vrot.lane.b32.xlu0 %v738, 127
      %v820 = vpop.permute.xlu0 %819
      %821 = vrot.lane.b32.xlu0 %v741, 127
      %v822 = vpop.permute.xlu0 %821
      %823 = vrot.lane.b32.xlu0 %v739, 127
      %v824 = vpop.permute.xlu0 %823
      %825 = vrot.lane.b32.xlu0 %v742, 127
      %v826 = vpop.permute.xlu0 %825
      %v827 = vsel %vm549, %v820, %v824
      %v828 = vsel %vm549, %v822, %v826
      %v829 = vsel %vm549, %v816, %v820
      %v830 = vsel %vm549, %v818, %v822
      %v831 = vsel %vm549, %v824, %v816
      %v832 = vsel %vm549, %v826, %v818
      %833 = vrot.lane.b32.xlu0 %v737, 111
      %v834 = vpop.permute.xlu0 %833
      %835 = vrot.lane.b32.xlu0 %v740, 111
      %v836 = vpop.permute.xlu0 %835
      %837 = vrot.lane.b32.xlu0 %v738, 111
      %v838 = vpop.permute.xlu0 %837
      %839 = vrot.lane.b32.xlu0 %v741, 111
      %v840 = vpop.permute.xlu0 %839
      %841 = vrot.lane.b32.xlu0 %v739, 111
      %v842 = vpop.permute.xlu0 %841
      %843 = vrot.lane.b32.xlu0 %v742, 111
      %v844 = vpop.permute.xlu0 %843
      %v845 = vsel %vm559, %v838, %v842
      %v846 = vsel %vm559, %v840, %v844
      %v847 = vsel %vm559, %v834, %v838
      %v848 = vsel %vm559, %v836, %v840
      %v849 = vsel %vm559, %v842, %v834
      %v850 = vsel %vm559, %v844, %v836
      %851 = vrot.lane.b32.xlu0 %v737, 110
      %v852 = vpop.permute.xlu0 %851
      %853 = vrot.lane.b32.xlu0 %v740, 110
      %v854 = vpop.permute.xlu0 %853
      %855 = vrot.lane.b32.xlu0 %v738, 110
      %v856 = vpop.permute.xlu0 %855
      %857 = vrot.lane.b32.xlu0 %v741, 110
      %v858 = vpop.permute.xlu0 %857
      %859 = vrot.lane.b32.xlu0 %v739, 110
      %v860 = vpop.permute.xlu0 %859
      %861 = vrot.lane.b32.xlu0 %v742, 110
      %v862 = vpop.permute.xlu0 %861
      %v863 = vsel %vm569, %v856, %v860
      %v864 = vsel %vm569, %v858, %v862
      %v865 = vsel %vm569, %v852, %v856
      %v866 = vsel %vm569, %v854, %v858
      %v867 = vsel %vm569, %v860, %v852
      %v868 = vsel %vm569, %v862, %v854
      %869 = vrot.lane.b32.xlu0 %v737, 109
      %v870 = vpop.permute.xlu0 %869
      %871 = vrot.lane.b32.xlu0 %v740, 109
      %v872 = vpop.permute.xlu0 %871
      %873 = vrot.lane.b32.xlu0 %v738, 109
      %v874 = vpop.permute.xlu0 %873
      %875 = vrot.lane.b32.xlu0 %v741, 109
      %v876 = vpop.permute.xlu0 %875
      %877 = vrot.lane.b32.xlu0 %v739, 109
      %v878 = vpop.permute.xlu0 %877
      %879 = vrot.lane.b32.xlu0 %v742, 109
      %v880 = vpop.permute.xlu0 %879
      %v881 = vsel %vm579, %v874, %v878
      %v882 = vsel %vm579, %v876, %v880
      %v883 = vsel %vm579, %v870, %v874
      %v884 = vsel %vm579, %v872, %v876
      %v885 = vsel %vm579, %v878, %v870
      %v886 = vsel %vm579, %v880, %v872
      %v887 = vld [vmem:[%s3] sm:$0xff]
      %v888 = vld [vmem:[%s3 + $0x8] sm:$0xff]
      %v889 = vpack.c.bf16 %v760, %v759
      %v890 = vpack.c.bf16 %v758, %v757
      %v891 = vpack.c.bf16 %v756, %v755
      %v892 = vpack.c.bf16 %v778, %v777
      %v893 = vpack.c.bf16 %v776, %v775
      %v894 = vpack.c.bf16 %v774, %v773
      %v895 = vpack.c.bf16 %v796, %v795
      %v896 = vpack.c.bf16 %v794, %v793
      %v897 = vpack.c.bf16 %v792, %v791
      %v898 = vpack.c.bf16 %v814, %v813
      %v899 = vpack.c.bf16 %v812, %v811
      %v900 = vpack.c.bf16 %v810, %v809
      %v901 = vpack.c.bf16 %v740, %v737
      %v902 = vpack.c.bf16 %v741, %v738
      %v903 = vpack.c.bf16 %v742, %v739
      %v904 = vpack.c.bf16 %v830, %v829
      %v905 = vpack.c.bf16 %v828, %v827
      %v906 = vpack.c.bf16 %v832, %v831
      %v907 = vpack.c.bf16 %v848, %v847
      %v908 = vpack.c.bf16 %v846, %v845
      %v909 = vpack.c.bf16 %v850, %v849
      %v910 = vpack.c.bf16 %v866, %v865
      %v911 = vpack.c.bf16 %v864, %v863
      %v912 = vpack.c.bf16 %v868, %v867
      %v913 = vpack.c.bf16 %v884, %v883
      %v914 = vpack.c.bf16 %v882, %v881
      %v915 = vpack.c.bf16 %v886, %v885
      %v916 = vld [vmem:[%s4] sm:$0xff]
      %v917 = vld [vmem:[%s4 + $0x8] sm:$0xff]
      %919 = vset.pattern.permute.xlu0 0
      %920 = vperm.xlu0 %919, %v916
      %v921 = vpop.permute.xlu0 %920
      %924 = vset.pattern.permute.xlu0 0
      %925 = vperm.xlu0 %924, %v917
      %v926 = vpop.permute.xlu0 %925
      %v930 = vunpack.c.l.b16 %v887
      %v931 = vunpack.c.h.b16 %v887
      %v932 = vunpack.c.l.b16 %v888
      %v933 = vunpack.c.h.b16 %v888
      %v934 = vpack.c.b16 %v932, %v930
      %v935 = vpack.c.b16 %v933, %v931
      %vm937 = vcmask 130048
      %v939 = vsel %vm937, %v935, 0
      %941 = vmatprep.subr.bf16.mxu0 %v890
      %942 = vmatpush1.bf16.msra.mxu0 %v889
      %943 = vmatprep.subr.bf16.mxu0 %v893
      %944 = vmatpush1.bf16.msra.mxu0 %v892
      %945 = vmatprep.subr.bf16.mxu0 %v896
      %946 = vmatpush1.bf16.msra.mxu0 %v895
      %947 = vmatprep.subr.bf16.mxu0 %v899
      %948 = vmatpush1.bf16.msra.mxu0 %v898
      %949 = vmatprep.subr.bf16.mxu0 %v902
      %950 = vmatpush1.bf16.msra.mxu0 %v901
      %951 = vmatprep.subr.bf16.mxu0 %v905
      %952 = vmatpush1.bf16.msra.mxu0 %v904
      %953 = vmatprep.subr.bf16.mxu0 %v908
      %954 = vmatpush1.bf16.msra.mxu0 %v907
      %955 = vmatprep.subr.bf16.mxu0 %v911
      %956 = vmatpush1.bf16.msra.mxu0 %v910
      %957 = vmatprep.subr.bf16.mxu0 %v914
      %958 = vmatpush1.bf16.msra.mxu0 %v913
      %959 = vmatprep.subr.bf16.mxu0 0
      %960 = vmatpush1.bf16.msra.mxu0 0
      %961 = vmatprep.subr.bf16.mxu0 0
      %962 = vmatpush1.bf16.msra.mxu0 0
      %963 = vmatprep.subr.bf16.mxu0 0
      %964 = vmatpush1.bf16.msra.mxu0 0
      %965 = vmatprep.subr.bf16.mxu0 0
      %966 = vmatpush1.bf16.msra.mxu0 0
      %967 = vmatprep.subr.bf16.mxu0 0
      %968 = vmatpush1.bf16.msra.mxu0 0
      %969 = vmatprep.subr.bf16.mxu0 0
      %970 = vmatpush1.bf16.msra.mxu0 0
      %971 = vmatprep.subr.bf16.mxu0 0
      %972 = vmatpush1.bf16.msra.mxu0 0
      %973 = vmatprep.mubr.bf16.mxu0 %v939
      %974 = vmatmul.mubr.bf16.gmra.mrb[0].mxu0 %v934
      %v975 = vpop.f32.mrb[0].mxu0
      %v976 = vadd.f32 %v921, %v975
      %v977 = vpop.f32.mrb[0].mxu0
      %v978 = vadd.f32 %v921, %v977
      %v979 = vpop.f32.mrb[0].mxu0
      %v980 = vadd.f32 %v926, %v979
      %v981 = vpop.f32.mrb[0].mxu0
      %v982 = vadd.f32 %v926, %v981
      %983 = vdwg.mxu0
      %984 = vmatprep.subr.bf16.mxu0 0
      %985 = vmatpush1.bf16.msra.mxu0 %v891
      %986 = vmatprep.subr.bf16.mxu0 0
      %987 = vmatpush1.bf16.msra.mxu0 %v894
      %988 = vmatprep.subr.bf16.mxu0 0
      %989 = vmatpush1.bf16.msra.mxu0 %v897
      %990 = vmatprep.subr.bf16.mxu0 0
      %991 = vmatpush1.bf16.msra.mxu0 %v900
      %992 = vmatprep.subr.bf16.mxu0 0
      %993 = vmatpush1.bf16.msra.mxu0 %v903
      %994 = vmatprep.subr.bf16.mxu0 0
      %995 = vmatpush1.bf16.msra.mxu0 %v906
      %996 = vmatprep.subr.bf16.mxu0 0
      %997 = vmatpush1.bf16.msra.mxu0 %v909
      %998 = vmatprep.subr.bf16.mxu0 0
      %999 = vmatpush1.bf16.msra.mxu0 %v912
      %1000 = vmatprep.subr.bf16.mxu0 0
      %1001 = vmatpush1.bf16.msra.mxu0 %v915
      %1002 = vmatprep.subr.bf16.mxu0 0
      %1003 = vmatpush1.bf16.msra.mxu0 0
      %1004 = vmatprep.subr.bf16.mxu0 0
      %1005 = vmatpush1.bf16.msra.mxu0 0
      %1006 = vmatprep.subr.bf16.mxu0 0
      %1007 = vmatpush1.bf16.msra.mxu0 0
      %1008 = vmatprep.subr.bf16.mxu0 0
      %1009 = vmatpush1.bf16.msra.mxu0 0
      %1010 = vmatprep.subr.bf16.mxu0 0
      %1011 = vmatpush1.bf16.msra.mxu0 0
      %1012 = vmatprep.subr.bf16.mxu0 0
      %1013 = vmatpush1.bf16.msra.mxu0 0
      %1014 = vmatprep.subr.bf16.mxu0 0
      %1015 = vmatpush1.bf16.msra.mxu0 0
      %1016 = vmatprep.mubr.bf16.mxu0 %v939
      %1017 = vmatmul.mubr.bf16.gmra.mrb[0].mxu0 %v934
      %v1018 = vpop.f32.mrb[0].mxu0
      %v1019 = vadd.f32 %v921, %v1018
      %v1020 = vpop.f32.mrb[0].mxu0
      %v1021 = vpop.f32.mrb[0].mxu0
      %v1022 = vadd.f32 %v926, %v1021
      %v1023 = vpop.f32.mrb[0].mxu0
      %1024 = vdwg.mxu0
      %v1025 = vmax.f32 %v976, 0.0
      %v1026 = vmax.f32 %v978, 0.0
      %v1027 = vmax.f32 %v1019, 0.0
      %v1028 = vmax.f32 %v980, 0.0
      %v1029 = vmax.f32 %v982, 0.0
      %v1030 = vmax.f32 %v1022, 0.0
      %v1031 = vmul.f32 %v1025, %v725
      %v1032 = vmul.f32 %v1026, %v729
      %v1033 = vmul.f32 %v1027, %v733
      %v1034 = vmul.f32 %v1028, %v725
      %v1035 = vmul.f32 %v1029, %v729
      %v1036 = vmul.f32 %v1030, %v733
      %1037 = vrot.lane.b32.xlu0 %v1031, 19
      %v1038 = vpop.permute.xlu0 %1037
      %1039 = vrot.lane.b32.xlu0 %v1034, 19
      %v1040 = vpop.permute.xlu0 %1039
      %1041 = vrot.lane.b32.xlu0 %v1032, 19
      %v1042 = vpop.permute.xlu0 %1041
      %1043 = vrot.lane.b32.xlu0 %v1035, 19
      %v1044 = vpop.permute.xlu0 %1043
      %1045 = vrot.lane.b32.xlu0 %v1033, 19
      %v1046 = vpop.permute.xlu0 %1045
      %1047 = vrot.lane.b32.xlu0 %v1036, 19
      %v1048 = vpop.permute.xlu0 %1047
      %v1049 = vsel %vm509, %v1042, %v1046
      %v1050 = vsel %vm509, %v1044, %v1048
      %v1051 = vsel %vm509, %v1038, %v1042
      %v1052 = vsel %vm509, %v1040, %v1044
      %v1053 = vsel %vm509, %v1046, %v1038
      %v1054 = vsel %vm509, %v1048, %v1040
      %1055 = vrot.lane.b32.xlu0 %v1031, 18
      %v1056 = vpop.permute.xlu0 %1055
      %1057 = vrot.lane.b32.xlu0 %v1034, 18
      %v1058 = vpop.permute.xlu0 %1057
      %1059 = vrot.lane.b32.xlu0 %v1032, 18
      %v1060 = vpop.permute.xlu0 %1059
      %1061 = vrot.lane.b32.xlu0 %v1035, 18
      %v1062 = vpop.permute.xlu0 %1061
      %1063 = vrot.lane.b32.xlu0 %v1033, 18
      %v1064 = vpop.permute.xlu0 %1063
      %1065 = vrot.lane.b32.xlu0 %v1036, 18
      %v1066 = vpop.permute.xlu0 %1065
      %v1067 = vsel %vm519, %v1060, %v1064
      %v1068 = vsel %vm519, %v1062, %v1066
      %v1069 = vsel %vm519, %v1056, %v1060
      %v1070 = vsel %vm519, %v1058, %v1062
      %v1071 = vsel %vm519, %v1064, %v1056
      %v1072 = vsel %vm519, %v1066, %v1058
      %1073 = vrot.lane.b32.xlu0 %v1031, 17
      %v1074 = vpop.permute.xlu0 %1073
      %1075 = vrot.lane.b32.xlu0 %v1034, 17
      %v1076 = vpop.permute.xlu0 %1075
      %1077 = vrot.lane.b32.xlu0 %v1032, 17
      %v1078 = vpop.permute.xlu0 %1077
      %1079 = vrot.lane.b32.xlu0 %v1035, 17
      %v1080 = vpop.permute.xlu0 %1079
      %1081 = vrot.lane.b32.xlu0 %v1033, 17
      %v1082 = vpop.permute.xlu0 %1081
      %1083 = vrot.lane.b32.xlu0 %v1036, 17
      %v1084 = vpop.permute.xlu0 %1083
      %v1085 = vsel %vm529, %v1078, %v1082
      %v1086 = vsel %vm529, %v1080, %v1084
      %v1087 = vsel %vm529, %v1074, %v1078
      %v1088 = vsel %vm529, %v1076, %v1080
      %v1089 = vsel %vm529, %v1082, %v1074
      %v1090 = vsel %vm529, %v1084, %v1076
      %1091 = vrot.lane.b32.xlu0 %v1031, 1
      %v1092 = vpop.permute.xlu0 %1091
      %1093 = vrot.lane.b32.xlu0 %v1034, 1
      %v1094 = vpop.permute.xlu0 %1093
      %1095 = vrot.lane.b32.xlu0 %v1032, 1
      %v1096 = vpop.permute.xlu0 %1095
      %1097 = vrot.lane.b32.xlu0 %v1035, 1
      %v1098 = vpop.permute.xlu0 %1097
      %1099 = vrot.lane.b32.xlu0 %v1033, 1
      %v1100 = vpop.permute.xlu0 %1099
      %1101 = vrot.lane.b32.xlu0 %v1036, 1
      %v1102 = vpop.permute.xlu0 %1101
      %v1103 = vsel %vm539, %v1096, %v1100
      %v1104 = vsel %vm539, %v1098, %v1102
      %v1105 = vsel %vm539, %v1092, %v1096
      %v1106 = vsel %vm539, %v1094, %v1098
      %v1107 = vsel %vm539, %v1100, %v1092
      %v1108 = vsel %vm539, %v1102, %v1094
      %1109 = vrot.lane.b32.xlu0 %v1031, 127
      %v1110 = vpop.permute.xlu0 %1109
      %1111 = vrot.lane.b32.xlu0 %v1034, 127
      %v1112 = vpop.permute.xlu0 %1111
      %1113 = vrot.lane.b32.xlu0 %v1032, 127
      %v1114 = vpop.permute.xlu0 %1113
      %1115 = vrot.lane.b32.xlu0 %v1035, 127
      %v1116 = vpop.permute.xlu0 %1115
      %1117 = vrot.lane.b32.xlu0 %v1033, 127
      %v1118 = vpop.permute.xlu0 %1117
      %1119 = vrot.lane.b32.xlu0 %v1036, 127
      %v1120 = vpop.permute.xlu0 %1119
      %v1121 = vsel %vm549, %v1114, %v1118
      %v1122 = vsel %vm549, %v1116, %v1120
      %v1123 = vsel %vm549, %v1110, %v1114
      %v1124 = vsel %vm549, %v1112, %v1116
      %v1125 = vsel %vm549, %v1118, %v1110
      %v1126 = vsel %vm549, %v1120, %v1112
      %1127 = vrot.lane.b32.xlu0 %v1031, 111
      %v1128 = vpop.permute.xlu0 %1127
      %1129 = vrot.lane.b32.xlu0 %v1034, 111
      %v1130 = vpop.permute.xlu0 %1129
      %1131 = vrot.lane.b32.xlu0 %v1032, 111
      %v1132 = vpop.permute.xlu0 %1131
      %1133 = vrot.lane.b32.xlu0 %v1035, 111
      %v1134 = vpop.permute.xlu0 %1133
      %1135 = vrot.lane.b32.xlu0 %v1033, 111
      %v1136 = vpop.permute.xlu0 %1135
      %1137 = vrot.lane.b32.xlu0 %v1036, 111
      %v1138 = vpop.permute.xlu0 %1137
      %v1139 = vsel %vm559, %v1132, %v1136
      %v1140 = vsel %vm559, %v1134, %v1138
      %v1141 = vsel %vm559, %v1128, %v1132
      %v1142 = vsel %vm559, %v1130, %v1134
      %v1143 = vsel %vm559, %v1136, %v1128
      %v1144 = vsel %vm559, %v1138, %v1130
      %1145 = vrot.lane.b32.xlu0 %v1031, 110
      %v1146 = vpop.permute.xlu0 %1145
      %1147 = vrot.lane.b32.xlu0 %v1034, 110
      %v1148 = vpop.permute.xlu0 %1147
      %1149 = vrot.lane.b32.xlu0 %v1032, 110
      %v1150 = vpop.permute.xlu0 %1149
      %1151 = vrot.lane.b32.xlu0 %v1035, 110
      %v1152 = vpop.permute.xlu0 %1151
      %1153 = vrot.lane.b32.xlu0 %v1033, 110
      %v1154 = vpop.permute.xlu0 %1153
      %1155 = vrot.lane.b32.xlu0 %v1036, 110
      %v1156 = vpop.permute.xlu0 %1155
      %v1157 = vsel %vm569, %v1150, %v1154
      %v1158 = vsel %vm569, %v1152, %v1156
      %v1159 = vsel %vm569, %v1146, %v1150
      %v1160 = vsel %vm569, %v1148, %v1152
      %v1161 = vsel %vm569, %v1154, %v1146
      %v1162 = vsel %vm569, %v1156, %v1148
      %1163 = vrot.lane.b32.xlu0 %v1031, 109
      %v1164 = vpop.permute.xlu0 %1163
      %1165 = vrot.lane.b32.xlu0 %v1034, 109
      %v1166 = vpop.permute.xlu0 %1165
      %1167 = vrot.lane.b32.xlu0 %v1032, 109
      %v1168 = vpop.permute.xlu0 %1167
      %1169 = vrot.lane.b32.xlu0 %v1035, 109
      %v1170 = vpop.permute.xlu0 %1169
      %1171 = vrot.lane.b32.xlu0 %v1033, 109
      %v1172 = vpop.permute.xlu0 %1171
      %1173 = vrot.lane.b32.xlu0 %v1036, 109
      %v1174 = vpop.permute.xlu0 %1173
      %v1175 = vsel %vm579, %v1168, %v1172
      %v1176 = vsel %vm579, %v1170, %v1174
      %v1177 = vsel %vm579, %v1164, %v1168
      %v1178 = vsel %vm579, %v1166, %v1170
      %v1179 = vsel %vm579, %v1172, %v1164
      %v1180 = vsel %vm579, %v1174, %v1166
      %v1181 = vld [vmem:[%s5] sm:$0xff]
      %v1182 = vld [vmem:[%s5 + $0x8] sm:$0xff]
      %v1183 = vpack.c.bf16 %v1054, %v1053
      %v1184 = vpack.c.bf16 %v1052, %v1051
      %v1185 = vpack.c.bf16 %v1050, %v1049
      %v1186 = vpack.c.bf16 %v1072, %v1071
      %v1187 = vpack.c.bf16 %v1070, %v1069
      %v1188 = vpack.c.bf16 %v1068, %v1067
      %v1189 = vpack.c.bf16 %v1090, %v1089
      %v1190 = vpack.c.bf16 %v1088, %v1087
      %v1191 = vpack.c.bf16 %v1086, %v1085
      %v1192 = vpack.c.bf16 %v1108, %v1107
      %v1193 = vpack.c.bf16 %v1106, %v1105
      %v1194 = vpack.c.bf16 %v1104, %v1103
      %v1195 = vpack.c.bf16 %v1034, %v1031
      %v1196 = vpack.c.bf16 %v1035, %v1032
      %v1197 = vpack.c.bf16 %v1036, %v1033
      %v1198 = vpack.c.bf16 %v1124, %v1123
      %v1199 = vpack.c.bf16 %v1122, %v1121
      %v1200 = vpack.c.bf16 %v1126, %v1125
      %v1201 = vpack.c.bf16 %v1142, %v1141
      %v1202 = vpack.c.bf16 %v1140, %v1139
      %v1203 = vpack.c.bf16 %v1144, %v1143
      %v1204 = vpack.c.bf16 %v1160, %v1159
      %v1205 = vpack.c.bf16 %v1158, %v1157
      %v1206 = vpack.c.bf16 %v1162, %v1161
      %v1207 = vpack.c.bf16 %v1178, %v1177
      %v1208 = vpack.c.bf16 %v1176, %v1175
      %v1209 = vpack.c.bf16 %v1180, %v1179
      %v1210 = vld [vmem:[%s6] sm:$0xff]
      %v1211 = vld [vmem:[%s6 + $0x8] sm:$0xff]
      %1213 = vset.pattern.permute.xlu0 0
      %1214 = vperm.xlu0 %1213, %v1210
      %v1215 = vpop.permute.xlu0 %1214
      %1218 = vset.pattern.permute.xlu0 0
      %1219 = vperm.xlu0 %1218, %v1211
      %v1220 = vpop.permute.xlu0 %1219
      %v1224 = vunpack.c.l.b16 %v1181
      %v1225 = vunpack.c.h.b16 %v1181
      %v1226 = vunpack.c.l.b16 %v1182
      %v1227 = vunpack.c.h.b16 %v1182
      %v1228 = vpack.c.b16 %v1226, %v1224
      %v1229 = vpack.c.b16 %v1227, %v1225
      %v1232 = vsel %vm937, %v1229, 0
      %1234 = vmatprep.subr.bf16.mxu0 %v1184
      %1235 = vmatpush1.bf16.msra.mxu0 %v1183
      %1236 = vmatprep.subr.bf16.mxu0 %v1187
      %1237 = vmatpush1.bf16.msra.mxu0 %v1186
      %1238 = vmatprep.subr.bf16.mxu0 %v1190
      %1239 = vmatpush1.bf16.msra.mxu0 %v1189
      %1240 = vmatprep.subr.bf16.mxu0 %v1193
      %1241 = vmatpush1.bf16.msra.mxu0 %v1192
      %1242 = vmatprep.subr.bf16.mxu0 %v1196
      %1243 = vmatpush1.bf16.msra.mxu0 %v1195
      %1244 = vmatprep.subr.bf16.mxu0 %v1199
      %1245 = vmatpush1.bf16.msra.mxu0 %v1198
      %1246 = vmatprep.subr.bf16.mxu0 %v1202
      %1247 = vmatpush1.bf16.msra.mxu0 %v1201
      %1248 = vmatprep.subr.bf16.mxu0 %v1205
      %1249 = vmatpush1.bf16.msra.mxu0 %v1204
      %1250 = vmatprep.subr.bf16.mxu0 %v1208
      %1251 = vmatpush1.bf16.msra.mxu0 %v1207
      %1252 = vmatprep.subr.bf16.mxu0 0
      %1253 = vmatpush1.bf16.msra.mxu0 0
      %1254 = vmatprep.subr.bf16.mxu0 0
      %1255 = vmatpush1.bf16.msra.mxu0 0
      %1256 = vmatprep.subr.bf16.mxu0 0
      %1257 = vmatpush1.bf16.msra.mxu0 0
      %1258 = vmatprep.subr.bf16.mxu0 0
      %1259 = vmatpush1.bf16.msra.mxu0 0
      %1260 = vmatprep.subr.bf16.mxu0 0
      %1261 = vmatpush1.bf16.msra.mxu0 0
      %1262 = vmatprep.subr.bf16.mxu0 0
      %1263 = vmatpush1.bf16.msra.mxu0 0
      %1264 = vmatprep.subr.bf16.mxu0 0
      %1265 = vmatpush1.bf16.msra.mxu0 0
      %1266 = vmatprep.mubr.bf16.mxu0 %v1232
      %1267 = vmatmul.mubr.bf16.gmra.mrb[0].mxu0 %v1228
      %v1268 = vpop.f32.mrb[0].mxu0
      %v1269 = vadd.f32 %v1215, %v1268
      %v1270 = vpop.f32.mrb[0].mxu0
      %v1271 = vadd.f32 %v1215, %v1270
      %v1272 = vpop.f32.mrb[0].mxu0
      %v1273 = vadd.f32 %v1220, %v1272
      %v1274 = vpop.f32.mrb[0].mxu0
      %v1275 = vadd.f32 %v1220, %v1274
      %1276 = vdwg.mxu0
      %1277 = vmatprep.subr.bf16.mxu0 0
      %1278 = vmatpush1.bf16.msra.mxu0 %v1185
      %1279 = vmatprep.subr.bf16.mxu0 0
      %1280 = vmatpush1.bf16.msra.mxu0 %v1188
      %1281 = vmatprep.subr.bf16.mxu0 0
      %1282 = vmatpush1.bf16.msra.mxu0 %v1191
      %1283 = vmatprep.subr.bf16.mxu0 0
      %1284 = vmatpush1.bf16.msra.mxu0 %v1194
      %1285 = vmatprep.subr.bf16.mxu0 0
      %1286 = vmatpush1.bf16.msra.mxu0 %v1197
      %1287 = vmatprep.subr.bf16.mxu0 0
      %1288 = vmatpush1.bf16.msra.mxu0 %v1200
      %1289 = vmatprep.subr.bf16.mxu0 0
      %1290 = vmatpush1.bf16.msra.mxu0 %v1203
      %1291 = vmatprep.subr.bf16.mxu0 0
      %1292 = vmatpush1.bf16.msra.mxu0 %v1206
      %1293 = vmatprep.subr.bf16.mxu0 0
      %1294 = vmatpush1.bf16.msra.mxu0 %v1209
      %1295 = vmatprep.subr.bf16.mxu0 0
      %1296 = vmatpush1.bf16.msra.mxu0 0
      %1297 = vmatprep.subr.bf16.mxu0 0
      %1298 = vmatpush1.bf16.msra.mxu0 0
      %1299 = vmatprep.subr.bf16.mxu0 0
      %1300 = vmatpush1.bf16.msra.mxu0 0
      %1301 = vmatprep.subr.bf16.mxu0 0
      %1302 = vmatpush1.bf16.msra.mxu0 0
      %1303 = vmatprep.subr.bf16.mxu0 0
      %1304 = vmatpush1.bf16.msra.mxu0 0
      %1305 = vmatprep.subr.bf16.mxu0 0
      %1306 = vmatpush1.bf16.msra.mxu0 0
      %1307 = vmatprep.subr.bf16.mxu0 0
      %1308 = vmatpush1.bf16.msra.mxu0 0
      %1309 = vmatprep.mubr.bf16.mxu0 %v1232
      %1310 = vmatmul.mubr.bf16.gmra.mrb[0].mxu0 %v1228
      %v1311 = vpop.f32.mrb[0].mxu0
      %v1312 = vadd.f32 %v1215, %v1311
      %v1313 = vpop.f32.mrb[0].mxu0
      %v1314 = vpop.f32.mrb[0].mxu0
      %v1315 = vadd.f32 %v1220, %v1314
      %v1316 = vpop.f32.mrb[0].mxu0
      %1317 = vdwg.mxu0
      %v1318 = vadd.f32 %v1269, %v737
      %v1319 = vadd.f32 %v1271, %v738
      %v1320 = vadd.f32 %v1312, %v739
      %v1321 = vadd.f32 %v1273, %v740
      %v1322 = vadd.f32 %v1275, %v741
      %v1323 = vadd.f32 %v1315, %v742
      %v1324 = vmax.f32 %v1318, 0.0
      %v1325 = vmax.f32 %v1319, 0.0
      %v1326 = vmax.f32 %v1320, 0.0
      %v1327 = vmax.f32 %v1321, 0.0
      %v1328 = vmax.f32 %v1322, 0.0
      %v1329 = vmax.f32 %v1323, 0.0
      %v1330 = vmul.f32 %v1324, %v725
      %v1331 = vmul.f32 %v1325, %v729
      %v1332 = vmul.f32 %v1326, %v733
      %v1333 = vmul.f32 %v1327, %v725
      %v1334 = vmul.f32 %v1328, %v729
      %v1335 = vmul.f32 %v1329, %v733
      %1336 = vrot.lane.b32.xlu0 %v1330, 19
      %v1337 = vpop.permute.xlu0 %1336
      %1338 = vrot.lane.b32.xlu0 %v1333, 19
      %v1339 = vpop.permute.xlu0 %1338
      %1340 = vrot.lane.b32.xlu0 %v1331, 19
      %v1341 = vpop.permute.xlu0 %1340
      %1342 = vrot.lane.b32.xlu0 %v1334, 19
      %v1343 = vpop.permute.xlu0 %1342
      %1344 = vrot.lane.b32.xlu0 %v1332, 19
      %v1345 = vpop.permute.xlu0 %1344
      %1346 = vrot.lane.b32.xlu0 %v1335, 19
      %v1347 = vpop.permute.xlu0 %1346
      %v1348 = vsel %vm509, %v1341, %v1345
      %v1349 = vsel %vm509, %v1343, %v1347
      %v1350 = vsel %vm509, %v1337, %v1341
      %v1351 = vsel %vm509, %v1339, %v1343
      %v1352 = vsel %vm509, %v1345, %v1337
      %v1353 = vsel %vm509, %v1347, %v1339
      %1354 = vrot.lane.b32.xlu0 %v1330, 18
      %v1355 = vpop.permute.xlu0 %1354
      %1356 = vrot.lane.b32.xlu0 %v1333, 18
      %v1357 = vpop.permute.xlu0 %1356
      %1358 = vrot.lane.b32.xlu0 %v1331, 18
      %v1359 = vpop.permute.xlu0 %1358
      %1360 = vrot.lane.b32.xlu0 %v1334, 18
      %v1361 = vpop.permute.xlu0 %1360
      %1362 = vrot.lane.b32.xlu0 %v1332, 18
      %v1363 = vpop.permute.xlu0 %1362
      %1364 = vrot.lane.b32.xlu0 %v1335, 18
      %v1365 = vpop.permute.xlu0 %1364
      %v1366 = vsel %vm519, %v1359, %v1363
      %v1367 = vsel %vm519, %v1361, %v1365
      %v1368 = vsel %vm519, %v1355, %v1359
      %v1369 = vsel %vm519, %v1357, %v1361
      %v1370 = vsel %vm519, %v1363, %v1355
      %v1371 = vsel %vm519, %v1365, %v1357
      %1372 = vrot.lane.b32.xlu0 %v1330, 17
      %v1373 = vpop.permute.xlu0 %1372
      %1374 = vrot.lane.b32.xlu0 %v1333, 17
      %v1375 = vpop.permute.xlu0 %1374
      %1376 = vrot.lane.b32.xlu0 %v1331, 17
      %v1377 = vpop.permute.xlu0 %1376
      %1378 = vrot.lane.b32.xlu0 %v1334, 17
      %v1379 = vpop.permute.xlu0 %1378
      %1380 = vrot.lane.b32.xlu0 %v1332, 17
      %v1381 = vpop.permute.xlu0 %1380
      %1382 = vrot.lane.b32.xlu0 %v1335, 17
      %v1383 = vpop.permute.xlu0 %1382
      %v1384 = vsel %vm529, %v1377, %v1381
      %v1385 = vsel %vm529, %v1379, %v1383
      %v1386 = vsel %vm529, %v1373, %v1377
      %v1387 = vsel %vm529, %v1375, %v1379
      %v1388 = vsel %vm529, %v1381, %v1373
      %v1389 = vsel %vm529, %v1383, %v1375
      %1390 = vrot.lane.b32.xlu0 %v1330, 1
      %v1391 = vpop.permute.xlu0 %1390
      %1392 = vrot.lane.b32.xlu0 %v1333, 1
      %v1393 = vpop.permute.xlu0 %1392
      %1394 = vrot.lane.b32.xlu0 %v1331, 1
      %v1395 = vpop.permute.xlu0 %1394
      %1396 = vrot.lane.b32.xlu0 %v1334, 1
      %v1397 = vpop.permute.xlu0 %1396
      %1398 = vrot.lane.b32.xlu0 %v1332, 1
      %v1399 = vpop.permute.xlu0 %1398
      %1400 = vrot.lane.b32.xlu0 %v1335, 1
      %v1401 = vpop.permute.xlu0 %1400
      %v1402 = vsel %vm539, %v1395, %v1399
      %v1403 = vsel %vm539, %v1397, %v1401
      %v1404 = vsel %vm539, %v1391, %v1395
      %v1405 = vsel %vm539, %v1393, %v1397
      %v1406 = vsel %vm539, %v1399, %v1391
      %v1407 = vsel %vm539, %v1401, %v1393
      %1408 = vrot.lane.b32.xlu0 %v1330, 127
      %v1409 = vpop.permute.xlu0 %1408
      %1410 = vrot.lane.b32.xlu0 %v1333, 127
      %v1411 = vpop.permute.xlu0 %1410
      %1412 = vrot.lane.b32.xlu0 %v1331, 127
      %v1413 = vpop.permute.xlu0 %1412
      %1414 = vrot.lane.b32.xlu0 %v1334, 127
      %v1415 = vpop.permute.xlu0 %1414
      %1416 = vrot.lane.b32.xlu0 %v1332, 127
      %v1417 = vpop.permute.xlu0 %1416
      %1418 = vrot.lane.b32.xlu0 %v1335, 127
      %v1419 = vpop.permute.xlu0 %1418
      %v1420 = vsel %vm549, %v1413, %v1417
      %v1421 = vsel %vm549, %v1415, %v1419
      %v1422 = vsel %vm549, %v1409, %v1413
      %v1423 = vsel %vm549, %v1411, %v1415
      %v1424 = vsel %vm549, %v1417, %v1409
      %v1425 = vsel %vm549, %v1419, %v1411
      %1426 = vrot.lane.b32.xlu0 %v1330, 111
      %v1427 = vpop.permute.xlu0 %1426
      %1428 = vrot.lane.b32.xlu0 %v1333, 111
      %v1429 = vpop.permute.xlu0 %1428
      %1430 = vrot.lane.b32.xlu0 %v1331, 111
      %v1431 = vpop.permute.xlu0 %1430
      %1432 = vrot.lane.b32.xlu0 %v1334, 111
      %v1433 = vpop.permute.xlu0 %1432
      %1434 = vrot.lane.b32.xlu0 %v1332, 111
      %v1435 = vpop.permute.xlu0 %1434
      %1436 = vrot.lane.b32.xlu0 %v1335, 111
      %v1437 = vpop.permute.xlu0 %1436
      %v1438 = vsel %vm559, %v1431, %v1435
      %v1439 = vsel %vm559, %v1433, %v1437
      %v1440 = vsel %vm559, %v1427, %v1431
      %v1441 = vsel %vm559, %v1429, %v1433
      %v1442 = vsel %vm559, %v1435, %v1427
      %v1443 = vsel %vm559, %v1437, %v1429
      %1444 = vrot.lane.b32.xlu0 %v1330, 110
      %v1445 = vpop.permute.xlu0 %1444
      %1446 = vrot.lane.b32.xlu0 %v1333, 110
      %v1447 = vpop.permute.xlu0 %1446
      %1448 = vrot.lane.b32.xlu0 %v1331, 110
      %v1449 = vpop.permute.xlu0 %1448
      %1450 = vrot.lane.b32.xlu0 %v1334, 110
      %v1451 = vpop.permute.xlu0 %1450
      %1452 = vrot.lane.b32.xlu0 %v1332, 110
      %v1453 = vpop.permute.xlu0 %1452
      %1454 = vrot.lane.b32.xlu0 %v1335, 110
      %v1455 = vpop.permute.xlu0 %1454
      %v1456 = vsel %vm569, %v1449, %v1453
      %v1457 = vsel %vm569, %v1451, %v1455
      %v1458 = vsel %vm569, %v1445, %v1449
      %v1459 = vsel %vm569, %v1447, %v1451
      %v1460 = vsel %vm569, %v1453, %v1445
      %v1461 = vsel %vm569, %v1455, %v1447
      %1462 = vrot.lane.b32.xlu0 %v1330, 109
      %v1463 = vpop.permute.xlu0 %1462
      %1464 = vrot.lane.b32.xlu0 %v1333, 109
      %v1465 = vpop.permute.xlu0 %1464
      %1466 = vrot.lane.b32.xlu0 %v1331, 109
      %v1467 = vpop.permute.xlu0 %1466
      %1468 = vrot.lane.b32.xlu0 %v1334, 109
      %v1469 = vpop.permute.xlu0 %1468
      %1470 = vrot.lane.b32.xlu0 %v1332, 109
      %v1471 = vpop.permute.xlu0 %1470
      %1472 = vrot.lane.b32.xlu0 %v1335, 109
      %v1473 = vpop.permute.xlu0 %1472
      %v1474 = vsel %vm579, %v1467, %v1471
      %v1475 = vsel %vm579, %v1469, %v1473
      %v1476 = vsel %vm579, %v1463, %v1467
      %v1477 = vsel %vm579, %v1465, %v1469
      %v1478 = vsel %vm579, %v1471, %v1463
      %v1479 = vsel %vm579, %v1473, %v1465
      %v1480 = vld [vmem:[%s7] sm:$0xff]
      %v1481 = vld [vmem:[%s7 + $0x8] sm:$0xff]
      %v1482 = vld [vmem:[%s7 + $0x10] sm:$0xff]
      %v1483 = vld [vmem:[%s7 + $0x18] sm:$0xff]
      %v1484 = vld [vmem:[%s7 + $0x20] sm:$0xff]
      %v1485 = vld [vmem:[%s7 + $0x28] sm:$0xff]
      %v1486 = vld [vmem:[%s7 + $0x30] sm:$0xff]
      %v1487 = vld [vmem:[%s7 + $0x38] sm:$0xff]
      %v1488 = vpack.c.bf16 %v1353, %v1352
      %v1489 = vpack.c.bf16 %v1351, %v1350
      %v1490 = vpack.c.bf16 %v1349, %v1348
      %v1491 = vpack.c.bf16 %v1371, %v1370
      %v1492 = vpack.c.bf16 %v1369, %v1368
      %v1493 = vpack.c.bf16 %v1367, %v1366
      %v1494 = vpack.c.bf16 %v1389, %v1388
      %v1495 = vpack.c.bf16 %v1387, %v1386
      %v1496 = vpack.c.bf16 %v1385, %v1384
      %v1497 = vpack.c.bf16 %v1407, %v1406
      %v1498 = vpack.c.bf16 %v1405, %v1404
      %v1499 = vpack.c.bf16 %v1403, %v1402
      %v1500 = vpack.c.bf16 %v1333, %v1330
      %v1501 = vpack.c.bf16 %v1334, %v1331
      %v1502 = vpack.c.bf16 %v1335, %v1332
      %v1503 = vpack.c.bf16 %v1423, %v1422
      %v1504 = vpack.c.bf16 %v1421, %v1420
      %v1505 = vpack.c.bf16 %v1425, %v1424
      %v1506 = vpack.c.bf16 %v1441, %v1440
      %v1507 = vpack.c.bf16 %v1439, %v1438
      %v1508 = vpack.c.bf16 %v1443, %v1442
      %v1509 = vpack.c.bf16 %v1459, %v1458
      %v1510 = vpack.c.bf16 %v1457, %v1456
      %v1511 = vpack.c.bf16 %v1461, %v1460
      %v1512 = vpack.c.bf16 %v1477, %v1476
      %v1513 = vpack.c.bf16 %v1475, %v1474
      %v1514 = vpack.c.bf16 %v1479, %v1478
      %v1523 = vunpack.c.l.b16 %v1480
      %v1524 = vunpack.c.h.b16 %v1480
      %v1525 = vunpack.c.l.b16 %v1481
      %v1526 = vunpack.c.h.b16 %v1481
      %v1527 = vunpack.c.l.b16 %v1482
      %v1528 = vunpack.c.h.b16 %v1482
      %v1529 = vunpack.c.l.b16 %v1483
      %v1530 = vunpack.c.h.b16 %v1483
      %v1531 = vunpack.c.l.b16 %v1484
      %v1532 = vunpack.c.h.b16 %v1484
      %v1533 = vunpack.c.l.b16 %v1485
      %v1534 = vunpack.c.h.b16 %v1485
      %v1535 = vunpack.c.l.b16 %v1486
      %v1536 = vunpack.c.h.b16 %v1486
      %v1537 = vunpack.c.l.b16 %v1487
      %v1538 = vunpack.c.h.b16 %v1487
      %v1539 = vpack.c.b16 %v1525, %v1523
      %v1540 = vpack.c.b16 %v1526, %v1524
      %v1541 = vpack.c.b16 %v1529, %v1527
      %v1542 = vpack.c.b16 %v1530, %v1528
      %v1543 = vpack.c.b16 %v1533, %v1531
      %v1544 = vpack.c.b16 %v1534, %v1532
      %v1545 = vpack.c.b16 %v1537, %v1535
      %v1546 = vpack.c.b16 %v1538, %v1536
      %v1552 = vsel %vm937, %v1540, 0
      %v1555 = vsel %vm937, %v1542, 0
      %v1558 = vsel %vm937, %v1544, 0
      %v1561 = vsel %vm937, %v1546, 0
      %1563 = vmatprep.subr.bf16.mxu0 %v1489
      %1564 = vmatpush1.bf16.msra.mxu0 %v1488
      %1565 = vmatprep.subr.bf16.mxu0 %v1492
      %1566 = vmatpush1.bf16.msra.mxu0 %v1491
      %1567 = vmatprep.subr.bf16.mxu0 %v1495
      %1568 = vmatpush1.bf16.msra.mxu0 %v1494
      %1569 = vmatprep.subr.bf16.mxu0 %v1498
      %1570 = vmatpush1.bf16.msra.mxu0 %v1497
      %1571 = vmatprep.subr.bf16.mxu0 %v1501
      %1572 = vmatpush1.bf16.msra.mxu0 %v1500
      %1573 = vmatprep.subr.bf16.mxu0 %v1504
      %1574 = vmatpush1.bf16.msra.mxu0 %v1503
      %1575 = vmatprep.subr.bf16.mxu0 %v1507
      %1576 = vmatpush1.bf16.msra.mxu0 %v1506
      %1577 = vmatprep.subr.bf16.mxu0 %v1510
      %1578 = vmatpush1.bf16.msra.mxu0 %v1509
      %1579 = vmatprep.subr.bf16.mxu0 %v1513
      %1580 = vmatpush1.bf16.msra.mxu0 %v1512
      %1581 = vmatprep.subr.bf16.mxu0 0
      %1582 = vmatpush1.bf16.msra.mxu0 0
      %1583 = vmatprep.subr.bf16.mxu0 0
      %1584 = vmatpush1.bf16.msra.mxu0 0
      %1585 = vmatprep.subr.bf16.mxu0 0
      %1586 = vmatpush1.bf16.msra.mxu0 0
      %1587 = vmatprep.subr.bf16.mxu0 0
      %1588 = vmatpush1.bf16.msra.mxu0 0
      %1589 = vmatprep.subr.bf16.mxu0 0
      %1590 = vmatpush1.bf16.msra.mxu0 0
      %1591 = vmatprep.subr.bf16.mxu0 0
      %1592 = vmatpush1.bf16.msra.mxu0 0
      %1593 = vmatprep.subr.bf16.mxu0 0
      %1594 = vmatpush1.bf16.msra.mxu0 0
      %1595 = vmatprep.mubr.bf16.mxu0 %v1552
      %1596 = vmatmul.mubr.bf16.gmra.mrb[0].mxu0 %v1539
      %v1597 = vpop.f32.mrb[0].mxu0
      %v1598 = vadd.f32 0.0, %v1597
      %v1599 = vpop.f32.mrb[0].mxu0
      %v1600 = vadd.f32 0.0, %v1599
      %v1601 = vpop.f32.mrb[0].mxu0
      %v1602 = vadd.f32 0.0, %v1601
      %v1603 = vpop.f32.mrb[0].mxu0
      %v1604 = vadd.f32 0.0, %v1603
      %1605 = vmatprep.mubr.bf16.mxu0 %v1555
      %1606 = vmatmul.mubr.bf16.gmra.mrb[0].mxu0 %v1541
      %v1607 = vpop.f32.mrb[0].mxu0
      %v1608 = vadd.f32 0.0, %v1607
      %v1609 = vpop.f32.mrb[0].mxu0
      %v1610 = vadd.f32 0.0, %v1609
      %v1611 = vpop.f32.mrb[0].mxu0
      %v1612 = vadd.f32 0.0, %v1611
      %v1613 = vpop.f32.mrb[0].mxu0
      %v1614 = vadd.f32 0.0, %v1613
      %1615 = vmatprep.mubr.bf16.mxu0 %v1558
      %1616 = vmatmul.mubr.bf16.gmra.mrb[0].mxu0 %v1543
      %v1617 = vpop.f32.mrb[0].mxu0
      %v1618 = vadd.f32 0.0, %v1617
      %v1619 = vpop.f32.mrb[0].mxu0
      %v1620 = vadd.f32 0.0, %v1619
      %v1621 = vpop.f32.mrb[0].mxu0
      %v1622 = vadd.f32 0.0, %v1621
      %v1623 = vpop.f32.mrb[0].mxu0
      %v1624 = vadd.f32 0.0, %v1623
      %1625 = vmatprep.mubr.bf16.mxu0 %v1561
      %1626 = vmatmul.mubr.bf16.gmra.mrb[0].mxu0 %v1545
      %v1627 = vpop.f32.mrb[0].mxu0
      %v1628 = vadd.f32 0.0, %v1627
      %v1629 = vpop.f32.mrb[0].mxu0
      %v1630 = vadd.f32 0.0, %v1629
      %v1631 = vpop.f32.mrb[0].mxu0
      %v1632 = vadd.f32 0.0, %v1631
      %v1633 = vpop.f32.mrb[0].mxu0
      %v1634 = vadd.f32 0.0, %v1633
      %1635 = vdwg.mxu0
      %1636 = vmatprep.subr.bf16.mxu0 0
      %1637 = vmatpush1.bf16.msra.mxu0 %v1490
      %1638 = vmatprep.subr.bf16.mxu0 0
      %1639 = vmatpush1.bf16.msra.mxu0 %v1493
      %1640 = vmatprep.subr.bf16.mxu0 0
      %1641 = vmatpush1.bf16.msra.mxu0 %v1496
      %1642 = vmatprep.subr.bf16.mxu0 0
      %1643 = vmatpush1.bf16.msra.mxu0 %v1499
      %1644 = vmatprep.subr.bf16.mxu0 0
      %1645 = vmatpush1.bf16.msra.mxu0 %v1502
      %1646 = vmatprep.subr.bf16.mxu0 0
      %1647 = vmatpush1.bf16.msra.mxu0 %v1505
      %1648 = vmatprep.subr.bf16.mxu0 0
      %1649 = vmatpush1.bf16.msra.mxu0 %v1508
      %1650 = vmatprep.subr.bf16.mxu0 0
      %1651 = vmatpush1.bf16.msra.mxu0 %v1511
      %1652 = vmatprep.subr.bf16.mxu0 0
      %1653 = vmatpush1.bf16.msra.mxu0 %v1514
      %1654 = vmatprep.subr.bf16.mxu0 0
      %1655 = vmatpush1.bf16.msra.mxu0 0
      %1656 = vmatprep.subr.bf16.mxu0 0
      %1657 = vmatpush1.bf16.msra.mxu0 0
      %1658 = vmatprep.subr.bf16.mxu0 0
      %1659 = vmatpush1.bf16.msra.mxu0 0
      %1660 = vmatprep.subr.bf16.mxu0 0
      %1661 = vmatpush1.bf16.msra.mxu0 0
      %1662 = vmatprep.subr.bf16.mxu0 0
      %1663 = vmatpush1.bf16.msra.mxu0 0
      %1664 = vmatprep.subr.bf16.mxu0 0
      %1665 = vmatpush1.bf16.msra.mxu0 0
      %1666 = vmatprep.subr.bf16.mxu0 0
      %1667 = vmatpush1.bf16.msra.mxu0 0
      %1668 = vmatprep.mubr.bf16.mxu0 %v1552
      %1669 = vmatmul.mubr.bf16.gmra.mrb[0].mxu0 %v1539
      %v1670 = vpop.f32.mrb[0].mxu0
      %v1671 = vadd.f32 0.0, %v1670
      %v1672 = vpop.f32.mrb[0].mxu0
      %v1673 = vpop.f32.mrb[0].mxu0
      %v1674 = vadd.f32 0.0, %v1673
      %v1675 = vpop.f32.mrb[0].mxu0
      %1676 = vmatprep.mubr.bf16.mxu0 %v1555
      %1677 = vmatmul.mubr.bf16.gmra.mrb[0].mxu0 %v1541
      %v1678 = vpop.f32.mrb[0].mxu0
      %v1679 = vadd.f32 0.0, %v1678
      %v1680 = vpop.f32.mrb[0].mxu0
      %v1681 = vpop.f32.mrb[0].mxu0
      %v1682 = vadd.f32 0.0, %v1681
      %v1683 = vpop.f32.mrb[0].mxu0
      %1684 = vmatprep.mubr.bf16.mxu0 %v1558
      %1685 = vmatmul.mubr.bf16.gmra.mrb[0].mxu0 %v1543
      %v1686 = vpop.f32.mrb[0].mxu0
      %v1687 = vadd.f32 0.0, %v1686
      %v1688 = vpop.f32.mrb[0].mxu0
      %v1689 = vpop.f32.mrb[0].mxu0
      %v1690 = vadd.f32 0.0, %v1689
      %v1691 = vpop.f32.mrb[0].mxu0
      %1692 = vmatprep.mubr.bf16.mxu0 %v1561
      %1693 = vmatmul.mubr.bf16.gmra.mrb[0].mxu0 %v1545
      %v1694 = vpop.f32.mrb[0].mxu0
      %v1695 = vadd.f32 0.0, %v1694
      %v1696 = vpop.f32.mrb[0].mxu0
      %v1697 = vpop.f32.mrb[0].mxu0
      %v1698 = vadd.f32 0.0, %v1697
      %v1699 = vpop.f32.mrb[0].mxu0
      %1700 = vdwg.mxu0
      %v1701 = vpack.c.bf16 %v1602, %v1598
      %v1702 = vpack.c.bf16 %v1604, %v1600
      %v1703 = vpack.c.bf16 %v1674, %v1671
      %v1704 = vpack.c.bf16 %v1612, %v1608
      %v1705 = vpack.c.bf16 %v1614, %v1610
      %v1706 = vpack.c.bf16 %v1682, %v1679
      %v1707 = vpack.c.bf16 %v1622, %v1618
      %v1708 = vpack.c.bf16 %v1624, %v1620
      %v1709 = vpack.c.bf16 %v1690, %v1687
      %v1710 = vpack.c.bf16 %v1632, %v1628
      %v1711 = vpack.c.bf16 %v1634, %v1630
      %v1712 = vpack.c.bf16 %v1698, %v1695
      %v1713 = vld [vmem:[%s13] sm:$0xf]
      %v1714 = vld [vmem:[%s13 + $0x4] sm:$0xf]
      %v1715 = vld [vmem:[%s13 + $0x8] sm:$0xf]
      %v1716 = vld [vmem:[%s13 + $0xc] sm:$0xf]
      %v1717 = vld [vmem:[%s13 + $0x10] sm:$0xf]
      %v1718 = vld [vmem:[%s13 + $0x14] sm:$0xf]
      %v1719 = vld [vmem:[%s13 + $0x18] sm:$0xf]
      %v1720 = vld [vmem:[%s13 + $0x1c] sm:$0xf]
      %v1721 = vld [vmem:[%s13 + $0x20] sm:$0xf]
      %v1722 = vld [vmem:[%s13 + $0x24] sm:$0xf]
      %v1723 = vld [vmem:[%s13 + $0x28] sm:$0xf]
      %v1724 = vld [vmem:[%s13 + $0x2c] sm:$0xf]
      %v1725 = vld [vmem:[%s13 + $0x30] sm:$0xf]
      %v1726 = vld [vmem:[%s13 + $0x34] sm:$0xf]
      %v1727 = vld [vmem:[%s13 + $0x38] sm:$0xf]
      %v1728 = vld [vmem:[%s13 + $0x3c] sm:$0xf]
      %v1729 = vld [vmem:[%s13 + $0x40] sm:$0xf]
      %v1730 = vld [vmem:[%s13 + $0x44] sm:$0xf]
      %v1731 = vld [vmem:[%s13 + $0x48] sm:$0xf]
      %v1732 = vld [vmem:[%s13 + $0x4c] sm:$0xf]
      %v1733 = vld [vmem:[%s13 + $0x50] sm:$0xf]
      %v1734 = vld [vmem:[%s13 + $0x54] sm:$0xf]
      %v1735 = vld [vmem:[%s13 + $0x58] sm:$0xf]
      %v1736 = vld [vmem:[%s13 + $0x5c] sm:$0xf]
      %v1737 = vld [vmem:[%s13 + $0x60] sm:$0xf]
      %v1738 = vld [vmem:[%s13 + $0x64] sm:$0xf]
      %v1739 = vld [vmem:[%s13 + $0x68] sm:$0xf]
      %v1740 = vld [vmem:[%s13 + $0x6c] sm:$0xf]
      %v1741 = vld [vmem:[%s13 + $0x70] sm:$0xf]
      %v1742 = vld [vmem:[%s13 + $0x74] sm:$0xf]
      %v1743 = vld [vmem:[%s13 + $0x78] sm:$0xf]
      %v1744 = vld [vmem:[%s13 + $0x7c] sm:$0xf]
      %v1745 = vld [vmem:[%s13 + $0x80] sm:$0xf]
      %v1746 = vld [vmem:[%s13 + $0x84] sm:$0xf]
      %v1747 = vld [vmem:[%s13 + $0x88] sm:$0xf]
      %v1748 = vld [vmem:[%s13 + $0x8c] sm:$0xf]
      %v1749 = vld [vmem:[%s13 + $0x90] sm:$0xf]
      %v1750 = vld [vmem:[%s13 + $0x94] sm:$0xf]
      %v1751 = vld [vmem:[%s13 + $0x98] sm:$0xf]
      %v1752 = vld [vmem:[%s13 + $0x9c] sm:$0xf]
      %v1753 = vld [vmem:[%s13 + $0xa0] sm:$0xf]
      %v1754 = vld [vmem:[%s13 + $0xa4] sm:$0xf]
      %v1755 = vld [vmem:[%s13 + $0xa8] sm:$0xf]
      %v1756 = vld [vmem:[%s13 + $0xac] sm:$0xf]
      %v1757 = vld [vmem:[%s13 + $0xb0] sm:$0xf]
      %v1758 = vld [vmem:[%s13 + $0xb4] sm:$0xf]
      %v1759 = vld [vmem:[%s13 + $0xb8] sm:$0xf]
      %v1760 = vld [vmem:[%s13 + $0xbc] sm:$0xf]
      %v1761 = vld [vmem:[%s8] sm:$0xff]
      %v1762 = vld [vmem:[%s8 + $0x8] sm:$0xff]
      %v1763 = vld [vmem:[%s8 + $0x10] sm:$0xff]
      %v1764 = vld [vmem:[%s8 + $0x18] sm:$0xff]
      %v1765 = vld [vmem:[%s8 + $0x20] sm:$0xff]
      %v1766 = vld [vmem:[%s8 + $0x28] sm:$0xff]
      %v1767 = vld [vmem:[%s8 + $0x30] sm:$0xff]
      %v1768 = vld [vmem:[%s8 + $0x38] sm:$0xff]
      %1770 = vset.pattern.permute.xlu0 0
      %1771 = vperm.xlu0 %1770, %v1761
      %v1772 = vpop.permute.xlu0 %1771
      %1775 = vset.pattern.permute.xlu0 0
      %1776 = vperm.xlu0 %1775, %v1762
      %v1777 = vpop.permute.xlu0 %1776
      %1780 = vset.pattern.permute.xlu0 0
      %1781 = vperm.xlu0 %1780, %v1763
      %v1782 = vpop.permute.xlu0 %1781
      %1785 = vset.pattern.permute.xlu0 0
      %1786 = vperm.xlu0 %1785, %v1764
      %v1787 = vpop.permute.xlu0 %1786
      %1790 = vset.pattern.permute.xlu0 0
      %1791 = vperm.xlu0 %1790, %v1765
      %v1792 = vpop.permute.xlu0 %1791
      %1795 = vset.pattern.permute.xlu0 0
      %1796 = vperm.xlu0 %1795, %v1766
      %v1797 = vpop.permute.xlu0 %1796
      %1800 = vset.pattern.permute.xlu0 0
      %1801 = vperm.xlu0 %1800, %v1767
      %v1802 = vpop.permute.xlu0 %1801
      %1805 = vset.pattern.permute.xlu0 0
      %1806 = vperm.xlu0 %1805, %v1768
      %v1807 = vpop.permute.xlu0 %1806
      %v1857 = vunpack.c.l.b16 %v1713
      %v1858 = vunpack.c.l.b16 %v1714
      %v1859 = vunpack.c.l.b16 %v1715
      %v1860 = vunpack.c.l.b16 %v1716
      %v1861 = vunpack.c.l.b16 %v1717
      %v1862 = vunpack.c.l.b16 %v1718
      %v1863 = vunpack.c.l.b16 %v1719
      %v1864 = vunpack.c.l.b16 %v1720
      %v1865 = vunpack.c.l.b16 %v1721
      %v1866 = vunpack.c.l.b16 %v1722
      %v1867 = vunpack.c.l.b16 %v1723
      %v1868 = vunpack.c.l.b16 %v1724
      %v1869 = vunpack.c.l.b16 %v1725
      %v1870 = vunpack.c.l.b16 %v1726
      %v1871 = vunpack.c.l.b16 %v1727
      %v1872 = vunpack.c.l.b16 %v1728
      %v1873 = vunpack.c.l.b16 %v1729
      %v1874 = vunpack.c.l.b16 %v1730
      %v1875 = vunpack.c.l.b16 %v1731
      %v1876 = vunpack.c.l.b16 %v1732
      %v1877 = vunpack.c.l.b16 %v1733
      %v1878 = vunpack.c.l.b16 %v1734
      %v1879 = vunpack.c.l.b16 %v1735
      %v1880 = vunpack.c.l.b16 %v1736
      %v1881 = vunpack.c.l.b16 %v1737
      %v1882 = vunpack.c.l.b16 %v1738
      %v1883 = vunpack.c.l.b16 %v1739
      %v1884 = vunpack.c.l.b16 %v1740
      %v1885 = vunpack.c.l.b16 %v1741
      %v1886 = vunpack.c.l.b16 %v1742
      %v1887 = vunpack.c.l.b16 %v1743
      %v1888 = vunpack.c.l.b16 %v1744
      %v1889 = vunpack.c.l.b16 %v1745
      %v1890 = vunpack.c.l.b16 %v1746
      %v1891 = vunpack.c.l.b16 %v1747
      %v1892 = vunpack.c.l.b16 %v1748
      %v1893 = vunpack.c.l.b16 %v1749
      %v1894 = vunpack.c.l.b16 %v1750
      %v1895 = vunpack.c.l.b16 %v1751
      %v1896 = vunpack.c.l.b16 %v1752
      %v1897 = vunpack.c.l.b16 %v1753
      %v1898 = vunpack.c.l.b16 %v1754
      %v1899 = vunpack.c.l.b16 %v1755
      %v1900 = vunpack.c.l.b16 %v1756
      %v1901 = vunpack.c.l.b16 %v1757
      %v1902 = vunpack.c.l.b16 %v1758
      %v1903 = vunpack.c.l.b16 %v1759
      %v1904 = vunpack.c.l.b16 %v1760
      %v1905 = vpack.c.b16 %v1858, %v1857
      %v1906 = vpack.c.b16 %v1860, %v1859
      %v1907 = vpack.c.b16 %v1862, %v1861
      %v1908 = vpack.c.b16 %v1864, %v1863
      %v1909 = vpack.c.b16 %v1866, %v1865
      %v1910 = vpack.c.b16 %v1868, %v1867
      %v1911 = vpack.c.b16 %v1870, %v1869
      %v1912 = vpack.c.b16 %v1872, %v1871
      %v1913 = vpack.c.b16 %v1874, %v1873
      %v1914 = vpack.c.b16 %v1876, %v1875
      %v1915 = vpack.c.b16 %v1878, %v1877
      %v1916 = vpack.c.b16 %v1880, %v1879
      %v1917 = vpack.c.b16 %v1882, %v1881
      %v1918 = vpack.c.b16 %v1884, %v1883
      %v1919 = vpack.c.b16 %v1886, %v1885
      %v1920 = vpack.c.b16 %v1888, %v1887
      %v1921 = vpack.c.b16 %v1890, %v1889
      %v1922 = vpack.c.b16 %v1892, %v1891
      %v1923 = vpack.c.b16 %v1894, %v1893
      %v1924 = vpack.c.b16 %v1896, %v1895
      %v1925 = vpack.c.b16 %v1898, %v1897
      %v1926 = vpack.c.b16 %v1900, %v1899
      %v1927 = vpack.c.b16 %v1902, %v1901
      %v1928 = vpack.c.b16 %v1904, %v1903
      %1953 = vmatprep.subr.bf16.mxu0 0
      %1954 = vmatpush1.bf16.msra.mxu0 %v1905
      %1955 = vmatprep.subr.bf16.mxu0 0
      %1956 = vmatpush1.bf16.msra.mxu0 %v1906
      %1957 = vmatprep.subr.bf16.mxu0 0
      %1958 = vmatpush1.bf16.msra.mxu0 %v1907
      %1959 = vmatprep.subr.bf16.mxu0 0
      %1960 = vmatpush1.bf16.msra.mxu0 %v1908
      %1961 = vmatprep.subr.bf16.mxu0 0
      %1962 = vmatpush1.bf16.msra.mxu0 %v1909
      %1963 = vmatprep.subr.bf16.mxu0 0
      %1964 = vmatpush1.bf16.msra.mxu0 %v1910
      %1965 = vmatprep.subr.bf16.mxu0 0
      %1966 = vmatpush1.bf16.msra.mxu0 %v1911
      %1967 = vmatprep.subr.bf16.mxu0 0
      %1968 = vmatpush1.bf16.msra.mxu0 %v1912
      %1969 = vmatprep.subr.bf16.mxu0 0
      %1970 = vmatpush1.bf16.msra.mxu0 %v1913
      %1971 = vmatprep.subr.bf16.mxu0 0
      %1972 = vmatpush1.bf16.msra.mxu0 %v1914
      %1973 = vmatprep.subr.bf16.mxu0 0
      %1974 = vmatpush1.bf16.msra.mxu0 %v1915
      %1975 = vmatprep.subr.bf16.mxu0 0
      %1976 = vmatpush1.bf16.msra.mxu0 %v1916
      %1977 = vmatprep.subr.bf16.mxu0 0
      %1978 = vmatpush1.bf16.msra.mxu0 %v1917
      %1979 = vmatprep.subr.bf16.mxu0 0
      %1980 = vmatpush1.bf16.msra.mxu0 %v1918
      %1981 = vmatprep.subr.bf16.mxu0 0
      %1982 = vmatpush1.bf16.msra.mxu0 %v1919
      %1983 = vmatprep.subr.bf16.mxu0 0
      %1984 = vmatpush1.bf16.msra.mxu0 %v1920
      %1985 = vmatprep.mubr.bf16.mxu0 %v1702
      %1986 = vmatmul.mubr.bf16.gmra.mrb[0].mxu0 %v1701
      %v1987 = vpop.f32.mrb[0].mxu0
      %v1988 = vadd.f32 %v1772, %v1987
      %v1989 = vpop.f32.mrb[0].mxu0
      %v1990 = vpop.f32.mrb[0].mxu0
      %v1991 = vadd.f32 %v1777, %v1990
      %v1992 = vpop.f32.mrb[0].mxu0
      %1993 = vmatprep.mubr.bf16.mxu0 %v1705
      %1994 = vmatmul.mubr.bf16.gmra.mrb[0].mxu0 %v1704
      %v1995 = vpop.f32.mrb[0].mxu0
      %v1996 = vadd.f32 %v1782, %v1995
      %v1997 = vpop.f32.mrb[0].mxu0
      %v1998 = vpop.f32.mrb[0].mxu0
      %v1999 = vadd.f32 %v1787, %v1998
      %v2000 = vpop.f32.mrb[0].mxu0
      %2001 = vmatprep.mubr.bf16.mxu0 %v1708
      %2002 = vmatmul.mubr.bf16.gmra.mrb[0].mxu0 %v1707
      %v2003 = vpop.f32.mrb[0].mxu0
      %v2004 = vadd.f32 %v1792, %v2003
      %v2005 = vpop.f32.mrb[0].mxu0
      %v2006 = vpop.f32.mrb[0].mxu0
      %v2007 = vadd.f32 %v1797, %v2006
      %v2008 = vpop.f32.mrb[0].mxu0
      %2009 = vmatprep.mubr.bf16.mxu0 %v1711
      %2010 = vmatmul.mubr.bf16.gmra.mrb[0].mxu0 %v1710
      %v2011 = vpop.f32.mrb[0].mxu0
      %v2012 = vadd.f32 %v1802, %v2011
      %v2013 = vpop.f32.mrb[0].mxu0
      %v2014 = vpop.f32.mrb[0].mxu0
      %v2015 = vadd.f32 %v1807, %v2014
      %v2016 = vpop.f32.mrb[0].mxu0
      %2017 = vdwg.mxu0
      %2018 = vmatprep.subr.bf16.mxu0 0
      %2019 = vmatpush1.bf16.msra.mxu0 %v1921
      %2020 = vmatprep.subr.bf16.mxu0 0
      %2021 = vmatpush1.bf16.msra.mxu0 %v1922
      %2022 = vmatprep.subr.bf16.mxu0 0
      %2023 = vmatpush1.bf16.msra.mxu0 %v1923
      %2024 = vmatprep.subr.bf16.mxu0 0
      %2025 = vmatpush1.bf16.msra.mxu0 %v1924
      %2026 = vmatprep.subr.bf16.mxu0 0
      %2027 = vmatpush1.bf16.msra.mxu0 %v1925
      %2028 = vmatprep.subr.bf16.mxu0 0
      %2029 = vmatpush1.bf16.msra.mxu0 %v1926
      %2030 = vmatprep.subr.bf16.mxu0 0
      %2031 = vmatpush1.bf16.msra.mxu0 %v1927
      %2032 = vmatprep.subr.bf16.mxu0 0
      %2033 = vmatpush1.bf16.msra.mxu0 %v1928
      %2034 = vmatprep.subr.bf16.mxu0 0
      %2035 = vmatpush1.bf16.msra.mxu0 0
      %2036 = vmatprep.subr.bf16.mxu0 0
      %2037 = vmatpush1.bf16.msra.mxu0 0
      %2038 = vmatprep.subr.bf16.mxu0 0
      %2039 = vmatpush1.bf16.msra.mxu0 0
      %2040 = vmatprep.subr.bf16.mxu0 0
      %2041 = vmatpush1.bf16.msra.mxu0 0
      %2042 = vmatprep.subr.bf16.mxu0 0
      %2043 = vmatpush1.bf16.msra.mxu0 0
      %2044 = vmatprep.subr.bf16.mxu0 0
      %2045 = vmatpush1.bf16.msra.mxu0 0
      %2046 = vmatprep.subr.bf16.mxu0 0
      %2047 = vmatpush1.bf16.msra.mxu0 0
      %2048 = vmatprep.subr.bf16.mxu0 0
      %2049 = vmatpush1.bf16.msra.mxu0 0
      %2050 = vmatprep.mubr.bf16.mxu0 0
      %2051 = vmatmul.mubr.bf16.gmra.mrb[0].mxu0 %v1703
      %v2052 = vpop.f32.mrb[0].mxu0
      %v2053 = vadd.f32 %v1988, %v2052
      %v2054 = vpop.f32.mrb[0].mxu0
      %v2055 = vpop.f32.mrb[0].mxu0
      %v2056 = vadd.f32 %v1991, %v2055
      %v2057 = vpop.f32.mrb[0].mxu0
      %2058 = vmatprep.mubr.bf16.mxu0 0
      %2059 = vmatmul.mubr.bf16.gmra.mrb[0].mxu0 %v1706
      %v2060 = vpop.f32.mrb[0].mxu0
      %v2061 = vadd.f32 %v1996, %v2060
      %v2062 = vpop.f32.mrb[0].mxu0
      %v2063 = vpop.f32.mrb[0].mxu0
      %v2064 = vadd.f32 %v1999, %v2063
      %v2065 = vpop.f32.mrb[0].mxu0
      %2066 = vmatprep.mubr.bf16.mxu0 0
      %2067 = vmatmul.mubr.bf16.gmra.mrb[0].mxu0 %v1709
      %v2068 = vpop.f32.mrb[0].mxu0
      %v2069 = vadd.f32 %v2004, %v2068
      %v2070 = vpop.f32.mrb[0].mxu0
      %v2071 = vpop.f32.mrb[0].mxu0
      %v2072 = vadd.f32 %v2007, %v2071
      %v2073 = vpop.f32.mrb[0].mxu0
      %2074 = vmatprep.mubr.bf16.mxu0 0
      %2075 = vmatmul.mubr.bf16.gmra.mrb[0].mxu0 %v1712
      %v2076 = vpop.f32.mrb[0].mxu0
      %v2077 = vadd.f32 %v2012, %v2076
      %v2078 = vpop.f32.mrb[0].mxu0
      %v2079 = vpop.f32.mrb[0].mxu0
      %v2080 = vadd.f32 %v2015, %v2079
      %v2081 = vpop.f32.mrb[0].mxu0
      %2082 = vdwg.mxu0
      %v2083 = vmax.f32 %v2053, 0.0
      %v2084 = vmax.f32 %v2056, 0.0
      %v2085 = vmax.f32 %v2061, 0.0
      %v2086 = vmax.f32 %v2064, 0.0
      %v2088 = vlaneseq
      %v2089 = vshrl.u32 %v2088, 7
      %v2090 = vsub.s32 0, %v2089
      %v2091 = vrot.slane %v497, %v2090
      %v2093 = vmul.f32 %v2083, %v2091
      %v2094 = vmul.f32 %v2084, %v2091
      %v2095 = vmul.f32 %v2085, %v2091
      %v2096 = vmul.f32 %v2086, %v2091
      %2097 = vrot.lane.b32.xlu0 %v2093, 11
      %v2098 = vpop.permute.xlu0 %2097
      %2099 = vrot.lane.b32.xlu0 %v2094, 11
      %v2100 = vpop.permute.xlu0 %2099
      %2101 = vrot.lane.b32.xlu0 %v2095, 11
      %v2102 = vpop.permute.xlu0 %2101
      %2103 = vrot.lane.b32.xlu0 %v2096, 11
      %v2104 = vpop.permute.xlu0 %2103
      %2105 = vrot.lane.b32.xlu0 %v2093, 10
      %v2106 = vpop.permute.xlu0 %2105
      %2107 = vrot.lane.b32.xlu0 %v2094, 10
      %v2108 = vpop.permute.xlu0 %2107
      %2109 = vrot.lane.b32.xlu0 %v2095, 10
      %v2110 = vpop.permute.xlu0 %2109
      %2111 = vrot.lane.b32.xlu0 %v2096, 10
      %v2112 = vpop.permute.xlu0 %2111
      %2113 = vrot.lane.b32.xlu0 %v2093, 9
      %v2114 = vpop.permute.xlu0 %2113
      %2115 = vrot.lane.b32.xlu0 %v2094, 9
      %v2116 = vpop.permute.xlu0 %2115
      %2117 = vrot.lane.b32.xlu0 %v2095, 9
      %v2118 = vpop.permute.xlu0 %2117
      %2119 = vrot.lane.b32.xlu0 %v2096, 9
      %v2120 = vpop.permute.xlu0 %2119
      %2121 = vrot.lane.b32.xlu0 %v2093, 1
      %v2122 = vpop.permute.xlu0 %2121
      %2123 = vrot.lane.b32.xlu0 %v2094, 1
      %v2124 = vpop.permute.xlu0 %2123
      %2125 = vrot.lane.b32.xlu0 %v2095, 1
      %v2126 = vpop.permute.xlu0 %2125
      %2127 = vrot.lane.b32.xlu0 %v2096, 1
      %v2128 = vpop.permute.xlu0 %2127
      %2129 = vrot.lane.b32.xlu0 %v2093, 127
      %v2130 = vpop.permute.xlu0 %2129
      %2131 = vrot.lane.b32.xlu0 %v2094, 127
      %v2132 = vpop.permute.xlu0 %2131
      %2133 = vrot.lane.b32.xlu0 %v2095, 127
      %v2134 = vpop.permute.xlu0 %2133
      %2135 = vrot.lane.b32.xlu0 %v2096, 127
      %v2136 = vpop.permute.xlu0 %2135
      %2137 = vrot.lane.b32.xlu0 %v2093, 119
      %v2138 = vpop.permute.xlu0 %2137
      %2139 = vrot.lane.b32.xlu0 %v2094, 119
      %v2140 = vpop.permute.xlu0 %2139
      %2141 = vrot.lane.b32.xlu0 %v2095, 119
      %v2142 = vpop.permute.xlu0 %2141
      %2143 = vrot.lane.b32.xlu0 %v2096, 119
      %v2144 = vpop.permute.xlu0 %2143
      %2145 = vrot.lane.b32.xlu0 %v2093, 118
      %v2146 = vpop.permute.xlu0 %2145
      %2147 = vrot.lane.b32.xlu0 %v2094, 118
      %v2148 = vpop.permute.xlu0 %2147
      %2149 = vrot.lane.b32.xlu0 %v2095, 118
      %v2150 = vpop.permute.xlu0 %2149
      %2151 = vrot.lane.b32.xlu0 %v2096, 118
      %v2152 = vpop.permute.xlu0 %2151
      %2153 = vrot.lane.b32.xlu0 %v2093, 117
      %v2154 = vpop.permute.xlu0 %2153
      %2155 = vrot.lane.b32.xlu0 %v2094, 117
      %v2156 = vpop.permute.xlu0 %2155
      %2157 = vrot.lane.b32.xlu0 %v2095, 117
      %v2158 = vpop.permute.xlu0 %2157
      %2159 = vrot.lane.b32.xlu0 %v2096, 117
      %v2160 = vpop.permute.xlu0 %2159
      %v2161 = vld [vmem:[%s9] sm:$0xff]
      %v2162 = vld [vmem:[%s9 + $0x8] sm:$0xf]
      %v2163 = vld [vmem:[%s9 + $0xc] sm:$0xff]
      %v2164 = vld [vmem:[%s9 + $0x14] sm:$0xf]
      %v2165 = vld [vmem:[%s9 + $0x18] sm:$0xff]
      %v2166 = vld [vmem:[%s9 + $0x20] sm:$0xf]
      %v2167 = vld [vmem:[%s9 + $0x24] sm:$0xff]
      %v2168 = vld [vmem:[%s9 + $0x2c] sm:$0xf]
      %v2169 = vpack.c.bf16 %v2100, %v2098
      %v2170 = vpack.c.bf16 %v2104, %v2102
      %v2171 = vpack.c.bf16 %v2108, %v2106
      %v2172 = vpack.c.bf16 %v2112, %v2110
      %v2173 = vpack.c.bf16 %v2116, %v2114
      %v2174 = vpack.c.bf16 %v2120, %v2118
      %v2175 = vpack.c.bf16 %v2124, %v2122
      %v2176 = vpack.c.bf16 %v2128, %v2126
      %v2177 = vpack.c.bf16 %v2094, %v2093
      %v2178 = vpack.c.bf16 %v2096, %v2095
      %v2179 = vpack.c.bf16 %v2132, %v2130
      %v2180 = vpack.c.bf16 %v2136, %v2134
      %v2181 = vpack.c.bf16 %v2140, %v2138
      %v2182 = vpack.c.bf16 %v2144, %v2142
      %v2183 = vpack.c.bf16 %v2148, %v2146
      %v2184 = vpack.c.bf16 %v2152, %v2150
      %v2185 = vpack.c.bf16 %v2156, %v2154
      %v2186 = vpack.c.bf16 %v2160, %v2158
      %v2187 = vld [vmem:[%s10] sm:$0xff]
      %v2188 = vld [vmem:[%s10 + $0x8] sm:$0xff]
      %v2189 = vld [vmem:[%s10 + $0x10] sm:$0xff]
      %v2190 = vld [vmem:[%s10 + $0x18] sm:$0xff]
      %2192 = vset.pattern.permute.xlu0 0
      %2193 = vperm.xlu0 %2192, %v2187
      %v2194 = vpop.permute.xlu0 %2193
      %2197 = vset.pattern.permute.xlu0 0
      %2198 = vperm.xlu0 %2197, %v2188
      %v2199 = vpop.permute.xlu0 %2198
      %2202 = vset.pattern.permute.xlu0 0
      %2203 = vperm.xlu0 %2202, %v2189
      %v2204 = vpop.permute.xlu0 %2203
      %2207 = vset.pattern.permute.xlu0 0
      %2208 = vperm.xlu0 %2207, %v2190
      %v2209 = vpop.permute.xlu0 %2208
      %v2219 = vunpack.c.l.b16 %v2161
      %v2220 = vunpack.c.h.b16 %v2161
      %v2221 = vunpack.c.l.b16 %v2162
      %v2222 = vunpack.c.l.b16 %v2163
      %v2223 = vunpack.c.h.b16 %v2163
      %v2224 = vunpack.c.l.b16 %v2164
      %v2225 = vunpack.c.l.b16 %v2165
      %v2226 = vunpack.c.h.b16 %v2165
      %v2227 = vunpack.c.l.b16 %v2166
      %v2228 = vunpack.c.l.b16 %v2167
      %v2229 = vunpack.c.h.b16 %v2167
      %v2230 = vunpack.c.l.b16 %v2168
      %v2231 = vpack.c.b16 %v2222, %v2219
      %v2232 = vpack.c.b16 %v2223, %v2220
      %v2233 = vpack.c.b16 %v2224, %v2221
      %v2234 = vpack.c.b16 %v2228, %v2225
      %v2235 = vpack.c.b16 %v2229, %v2226
      %v2236 = vpack.c.b16 %v2230, %v2227
      %vm2241 = vcmask 261120
      %v2243 = vsel %vm2241, %v2233, 0
      %v2246 = vsel %vm2241, %v2236, 0
      %2248 = vmatprep.subr.bf16.mxu0 0
      %2249 = vmatpush1.bf16.msra.mxu0 %v2169
      %2250 = vmatprep.subr.bf16.mxu0 0
      %2251 = vmatpush1.bf16.msra.mxu0 %v2170
      %2252 = vmatprep.subr.bf16.mxu0 0
      %2253 = vmatpush1.bf16.msra.mxu0 %v2171
      %2254 = vmatprep.subr.bf16.mxu0 0
      %2255 = vmatpush1.bf16.msra.mxu0 %v2172
      %2256 = vmatprep.subr.bf16.mxu0 0
      %2257 = vmatpush1.bf16.msra.mxu0 %v2173
      %2258 = vmatprep.subr.bf16.mxu0 0
      %2259 = vmatpush1.bf16.msra.mxu0 %v2174
      %2260 = vmatprep.subr.bf16.mxu0 0
      %2261 = vmatpush1.bf16.msra.mxu0 %v2175
      %2262 = vmatprep.subr.bf16.mxu0 0
      %2263 = vmatpush1.bf16.msra.mxu0 %v2176
      %2264 = vmatprep.subr.bf16.mxu0 0
      %2265 = vmatpush1.bf16.msra.mxu0 %v2177
      %2266 = vmatprep.subr.bf16.mxu0 0
      %2267 = vmatpush1.bf16.msra.mxu0 %v2178
      %2268 = vmatprep.subr.bf16.mxu0 0
      %2269 = vmatpush1.bf16.msra.mxu0 %v2179
      %2270 = vmatprep.subr.bf16.mxu0 0
      %2271 = vmatpush1.bf16.msra.mxu0 %v2180
      %2272 = vmatprep.subr.bf16.mxu0 0
      %2273 = vmatpush1.bf16.msra.mxu0 %v2181
      %2274 = vmatprep.subr.bf16.mxu0 0
      %2275 = vmatpush1.bf16.msra.mxu0 %v2182
      %2276 = vmatprep.subr.bf16.mxu0 0
      %2277 = vmatpush1.bf16.msra.mxu0 %v2183
      %2278 = vmatprep.subr.bf16.mxu0 0
      %2279 = vmatpush1.bf16.msra.mxu0 %v2184
      %2280 = vmatprep.mubr.bf16.mxu0 %v2232
      %2281 = vmatmul.mubr.bf16.gmra.mrb[0].mxu0 %v2231
      %v2282 = vpop.f32.mrb[0].mxu0
      %v2283 = vadd.f32 %v2194, %v2282
      %v2284 = vpop.f32.mrb[0].mxu0
      %v2285 = vpop.f32.mrb[0].mxu0
      %v2286 = vadd.f32 %v2199, %v2285
      %v2287 = vpop.f32.mrb[0].mxu0
      %2288 = vmatprep.mubr.bf16.mxu0 %v2235
      %2289 = vmatmul.mubr.bf16.gmra.mrb[0].mxu0 %v2234
      %v2290 = vpop.f32.mrb[0].mxu0
      %v2291 = vadd.f32 %v2204, %v2290
      %v2292 = vpop.f32.mrb[0].mxu0
      %v2293 = vpop.f32.mrb[0].mxu0
      %v2294 = vadd.f32 %v2209, %v2293
      %v2295 = vpop.f32.mrb[0].mxu0
      %2296 = vdwg.mxu0
      %2297 = vmatprep.subr.bf16.mxu0 0
      %2298 = vmatpush1.bf16.msra.mxu0 %v2185
      %2299 = vmatprep.subr.bf16.mxu0 0
      %2300 = vmatpush1.bf16.msra.mxu0 %v2186
      %2301 = vmatprep.subr.bf16.mxu0 0
      %2302 = vmatpush1.bf16.msra.mxu0 0
      %2303 = vmatprep.subr.bf16.mxu0 0
      %2304 = vmatpush1.bf16.msra.mxu0 0
      %2305 = vmatprep.subr.bf16.mxu0 0
      %2306 = vmatpush1.bf16.msra.mxu0 0
      %2307 = vmatprep.subr.bf16.mxu0 0
      %2308 = vmatpush1.bf16.msra.mxu0 0
      %2309 = vmatprep.subr.bf16.mxu0 0
      %2310 = vmatpush1.bf16.msra.mxu0 0
      %2311 = vmatprep.subr.bf16.mxu0 0
      %2312 = vmatpush1.bf16.msra.mxu0 0
      %2313 = vmatprep.subr.bf16.mxu0 0
      %2314 = vmatpush1.bf16.msra.mxu0 0
      %2315 = vmatprep.subr.bf16.mxu0 0
      %2316 = vmatpush1.bf16.msra.mxu0 0
      %2317 = vmatprep.subr.bf16.mxu0 0
      %2318 = vmatpush1.bf16.msra.mxu0 0
      %2319 = vmatprep.subr.bf16.mxu0 0
      %2320 = vmatpush1.bf16.msra.mxu0 0
      %2321 = vmatprep.subr.bf16.mxu0 0
      %2322 = vmatpush1.bf16.msra.mxu0 0
      %2323 = vmatprep.subr.bf16.mxu0 0
      %2324 = vmatpush1.bf16.msra.mxu0 0
      %2325 = vmatprep.subr.bf16.mxu0 0
      %2326 = vmatpush1.bf16.msra.mxu0 0
      %2327 = vmatprep.subr.bf16.mxu0 0
      %2328 = vmatpush1.bf16.msra.mxu0 0
      %2329 = vmatprep.mubr.bf16.mxu0 0
      %2330 = vmatmul.mubr.bf16.gmra.mrb[0].mxu0 %v2243
      %v2331 = vpop.f32.mrb[0].mxu0
      %v2332 = vadd.f32 %v2283, %v2331
      %v2333 = vpop.f32.mrb[0].mxu0
      %v2334 = vpop.f32.mrb[0].mxu0
      %v2335 = vadd.f32 %v2286, %v2334
      %v2336 = vpop.f32.mrb[0].mxu0
      %2337 = vmatprep.mubr.bf16.mxu0 0
      %2338 = vmatmul.mubr.bf16.gmra.mrb[0].mxu0 %v2246
      %v2339 = vpop.f32.mrb[0].mxu0
      %v2340 = vadd.f32 %v2291, %v2339
      %v2341 = vpop.f32.mrb[0].mxu0
      %v2342 = vpop.f32.mrb[0].mxu0
      %v2343 = vadd.f32 %v2294, %v2342
      %v2344 = vpop.f32.mrb[0].mxu0
      %2345 = vdwg.mxu0
      %v2346 = vadd.f32 %v2332, %v2069
      %v2347 = vadd.f32 %v2335, %v2072
      %v2348 = vadd.f32 %v2340, %v2077
      %v2349 = vadd.f32 %v2343, %v2080
      %v2350 = vmax.f32 %v2346, 0.0
      %v2351 = vmax.f32 %v2347, 0.0
      %v2352 = vmax.f32 %v2348, 0.0
      %v2353 = vmax.f32 %v2349, 0.0
      %v2354 = vpack.c.bf16 %v2351, %v2350
      %v2355 = vpack.c.bf16 %v2353, %v2352
      %v2356 = vld [vmem:[%s14] sm:$0xf]
      %v2357 = vld [vmem:[%s14 + $0x4] sm:$0xf]
      %v2358 = vld [vmem:[%s14 + $0x8] sm:$0xf]
      %v2359 = vld [vmem:[%s14 + $0xc] sm:$0xf]
      %v2360 = vld [vmem:[%s14 + $0x10] sm:$0xf]
      %v2361 = vld [vmem:[%s14 + $0x14] sm:$0xf]
      %v2362 = vld [vmem:[%s14 + $0x18] sm:$0xf]
      %v2363 = vld [vmem:[%s14 + $0x1c] sm:$0xf]
      %v2364 = vld [vmem:[%s14 + $0x20] sm:$0xf]
      %v2365 = vld [vmem:[%s14 + $0x24] sm:$0xf]
      %v2366 = vld [vmem:[%s14 + $0x28] sm:$0xf]
      %v2367 = vld [vmem:[%s14 + $0x2c] sm:$0xf]
      %v2368 = vld [vmem:[%s14 + $0x30] sm:$0xf]
      %v2369 = vld [vmem:[%s14 + $0x34] sm:$0xf]
      %v2370 = vld [vmem:[%s14 + $0x38] sm:$0xf]
      %v2371 = vld [vmem:[%s14 + $0x3c] sm:$0xf]
      %v2388 = vunpack.c.l.b16 %v2356
      %v2389 = vunpack.c.l.b16 %v2357
      %v2390 = vunpack.c.l.b16 %v2358
      %v2391 = vunpack.c.l.b16 %v2359
      %v2392 = vunpack.c.l.b16 %v2360
      %v2393 = vunpack.c.l.b16 %v2361
      %v2394 = vunpack.c.l.b16 %v2362
      %v2395 = vunpack.c.l.b16 %v2363
      %v2396 = vunpack.c.l.b16 %v2364
      %v2397 = vunpack.c.l.b16 %v2365
      %v2398 = vunpack.c.l.b16 %v2366
      %v2399 = vunpack.c.l.b16 %v2367
      %v2400 = vunpack.c.l.b16 %v2368
      %v2401 = vunpack.c.l.b16 %v2369
      %v2402 = vunpack.c.l.b16 %v2370
      %v2403 = vunpack.c.l.b16 %v2371
      %v2404 = vpack.c.b16 %v2389, %v2388
      %v2405 = vpack.c.b16 %v2391, %v2390
      %v2406 = vpack.c.b16 %v2393, %v2392
      %v2407 = vpack.c.b16 %v2395, %v2394
      %v2408 = vpack.c.b16 %v2397, %v2396
      %v2409 = vpack.c.b16 %v2399, %v2398
      %v2410 = vpack.c.b16 %v2401, %v2400
      %v2411 = vpack.c.b16 %v2403, %v2402
      %2420 = vmatprep.subr.bf16.mxu0 0
      %2421 = vmatpush1.bf16.msra.mxu0 %v2404
      %2422 = vmatprep.subr.bf16.mxu0 0
      %2423 = vmatpush1.bf16.msra.mxu0 %v2405
      %2424 = vmatprep.subr.bf16.mxu0 0
      %2425 = vmatpush1.bf16.msra.mxu0 %v2406
      %2426 = vmatprep.subr.bf16.mxu0 0
      %2427 = vmatpush1.bf16.msra.mxu0 %v2407
      %2428 = vmatprep.subr.bf16.mxu0 0
      %2429 = vmatpush1.bf16.msra.mxu0 %v2408
      %2430 = vmatprep.subr.bf16.mxu0 0
      %2431 = vmatpush1.bf16.msra.mxu0 %v2409
      %2432 = vmatprep.subr.bf16.mxu0 0
      %2433 = vmatpush1.bf16.msra.mxu0 %v2410
      %2434 = vmatprep.subr.bf16.mxu0 0
      %2435 = vmatpush1.bf16.msra.mxu0 %v2411
      %2436 = vmatprep.subr.bf16.mxu0 0
      %2437 = vmatpush1.bf16.msra.mxu0 0
      %2438 = vmatprep.subr.bf16.mxu0 0
      %2439 = vmatpush1.bf16.msra.mxu0 0
      %2440 = vmatprep.subr.bf16.mxu0 0
      %2441 = vmatpush1.bf16.msra.mxu0 0
      %2442 = vmatprep.subr.bf16.mxu0 0
      %2443 = vmatpush1.bf16.msra.mxu0 0
      %2444 = vmatprep.subr.bf16.mxu0 0
      %2445 = vmatpush1.bf16.msra.mxu0 0
      %2446 = vmatprep.subr.bf16.mxu0 0
      %2447 = vmatpush1.bf16.msra.mxu0 0
      %2448 = vmatprep.subr.bf16.mxu0 0
      %2449 = vmatpush1.bf16.msra.mxu0 0
      %2450 = vmatprep.subr.bf16.mxu0 0
      %2451 = vmatpush1.bf16.msra.mxu0 0
      %2452 = vmatprep.mubr.bf16.mxu0 0
      %2453 = vmatmul.mubr.bf16.gmra.mrb[0].mxu0 %v2354
      %v2454 = vpop.f32.mrb[0].mxu0
      %v2455 = vadd.f32 0.0, %v2454
      %v2456 = vpop.f32.mrb[0].mxu0
      %v2457 = vpop.f32.mrb[0].mxu0
      %v2458 = vadd.f32 0.0, %v2457
      %v2459 = vpop.f32.mrb[0].mxu0
      %2460 = vmatprep.mubr.bf16.mxu0 0
      %2461 = vmatmul.mubr.bf16.gmra.mrb[0].mxu0 %v2355
      %v2462 = vpop.f32.mrb[0].mxu0
      %v2463 = vadd.f32 0.0, %v2462
      %v2464 = vpop.f32.mrb[0].mxu0
      %v2465 = vpop.f32.mrb[0].mxu0
      %v2466 = vadd.f32 0.0, %v2465
      %v2467 = vpop.f32.mrb[0].mxu0
      %2468 = vdwg.mxu0
      %2469 = vst.msk [vmem:[%s494] sm:$0xff] %vm937, %v2455
      %2470 = vst.msk [vmem:[%s494 + $0x8] sm:$0xff] %vm937, %v2458
      %2471 = vst.msk [vmem:[%s494 + $0x10] sm:$0xff] %vm937, %v2463
      %2472 = vst.msk [vmem:[%s494 + $0x18] sm:$0xff] %vm937, %v2466
      %p2473 = scmp.lt.s32.totalorder %s26, 1
      %s2474 = scalar_select %p2473, %s26, 1
      %s2475 = smul.addr %s2474, 4
      %s2476 = smul.addr %s2475, 8
      %s2477 = scalar_lea.vmem %s15, %s2476
      // Predicated region
      $region81: #{vision_encoder_forward.1} parent=79 // pred_check
        %p2478 = pneg %p364
      $region82: #{vision_encoder_forward.1} parent=79 // pred_check_branch
        %2480 = sbr.rel (%p2478) target = $region84
      $region83: #{vision_encoder_forward.1} parent=79 // pred_region
        _
      $region84: #{vision_encoder_forward.1} parent=79 // pred_fallthru
        _
    $region80: #{vision_encoder_forward.1} parent=5 // pred_fallthru
      _
    %p2481 = scmp.le.s32.totalorder 2, %s21
    // Predicated region
    $region85: #{vision_encoder_forward.1} parent=5 // pred_check
      %p2482 = pneg %p2481
    $region86: #{vision_encoder_forward.1} parent=5 // pred_check_branch
      %2484 = sbr.rel (%p2482) target = $region88
    $region87: #{vision_encoder_forward.1} parent=5 // pred_region
      %s2485 = ssub.s32 %s21, 2
      // Predicated region
      $region89: #{vision_encoder_forward.1} parent=87 // pred_check
        %p2486 = pneg %p370
      $region90: #{vision_encoder_forward.1} parent=87 // pred_check_branch
        %2488 = sbr.rel (%p2486) target = $region92
      $region91: #{vision_encoder_forward.1} parent=87 // pred_region
        %p2489 = scmp.lt.s32.totalorder %s27, 1
        %s2490 = scalar_select %p2489, %s27, 1
        %s2491 = smul.addr %s2490, 4
        %s2492 = smul.addr %s2491, 8
        %s2493 = scalar_lea.vmem %s15, %s2492
      $region92: #{vision_encoder_forward.1} parent=87 // pred_fallthru
        _
    $region88: #{vision_encoder_forward.1} parent=5 // pred_fallthru
      _
  $region6: #{vision_encoder_forward.1} parent=0 // loop_footer
    %s25 = sadd.s32 1, %s21
  $region7: #{vision_encoder_forward.1} parent=0 // loop_footer_branch
    %20 = sbr.rel target = $region3
  $region8: #{vision_encoder_forward.1} parent=0 // loop_exit
    _

</llo_original>
